<compile_context>
chip_gen: v5e
topology: v5e:2x2
jax: 0.10.0
libtpu: 0.0.40
codegen_flags: <defaults>
</compile_context>

<pallas_src>
import jax
import jax.numpy as jnp
from jax.experimental import pallas as pl
from jax.experimental.pallas import tpu as pltpu


_LANES = 128
_BATCH_GRAIN = 16   # row granularity: bf16 output tiles need rows % 16 == 0
_NEG_BIG = -1e30    # finite "-inf" baked into padded class-logit bias lanes


def _round_up(x, m):
    return (x + m - 1) // m * m


def _cdiv(a, b):
    return -(-a // b)


def _pick_batch_tile(b_rows, tb):
    """Batch-tile rows: multiple of _BATCH_GRAIN, <= b_rows, and small enough
    that the grid has >= 2 tiles when the batch allows it (v7x has 2 TCs and
    the 'parallel' axis only helps with >= 2 tiles; harmless on 1-TC chips)."""
    tb = max(_BATCH_GRAIN, _round_up(tb, _BATCH_GRAIN))
    if b_rows > _BATCH_GRAIN:
        tb = min(tb, _round_up(_cdiv(b_rows, 2), _BATCH_GRAIN))
    return min(tb, b_rows)


def _make_mlp_kernel(num_hidden):
    """Fused MLP kernel.

    Ref order: x, then per hidden layer (w, b, shift), then (w_out, b_out),
    then out_ref.  All dots run bf16 x bf16 -> f32 on the MXU; the epilogue
    (bias, ReLU, BN shift, softmax) runs in f32 on the VPU.
    """

    def kernel(*refs):
        x_ref = refs[0]
        out_ref = refs[-1]
        params = refs[1:-1]

        # f32 arrives from HBM; cast to bf16 here (free under the DMA-bound
        # regime) instead of a separate XLA pass over x in the wrapper.
        h = x_ref[...].astype(jnp.bfloat16)  # (TB, d_in)

        idx = 0
        for _ in range(num_hidden):
            w_ref, b_ref, shift_ref = params[idx:idx + 3]
            idx += 3
            # Linear (MXU); eval-mode BN scale is pre-folded into w and b.
            a = jnp.dot(h, w_ref[...], preferred_element_type=jnp.float32)
            # ReLU, then the remaining BatchNorm shift.
            a = jnp.maximum(a + b_ref[...], 0.0) + shift_ref[...]
            h = a.astype(jnp.bfloat16)

        # Dropout(p=0.5) at inference is identity.
        w_out_ref, b_out_ref = params[idx], params[idx + 1]
        logits = jnp.dot(h, w_out_ref[...], preferred_element_type=jnp.float32)
        logits = logits + b_out_ref[...]  # padded class lanes get -1e30 bias

        # Numerically-stable softmax over the lane-dense (128-wide) class axis.
        # Exact divide (denominator is (TB, 1)) so rows sum to 1 to f32 rounding.
        m = jnp.max(logits, axis=-1, keepdims=True)
        e = jnp.exp(logits - m)
        denom = jnp.sum(e, axis=-1, keepdims=True)
        out_ref[...] = (e / denom).astype(out_ref.dtype)

    return kernel


def prepare_params(params):
    """Fold eval-mode BatchNorm into the Linear weights, pad feature dims to
    multiples of 128 lanes, and cast the matmul operands to bfloat16."""
    hidden = []
    for (w, b, scale, shift) in params["hidden"]:
        # BN(ReLU(x W + b)) = ReLU(x (W*s) + b*s) + shift, valid because s > 0
        # (default gamma=1, running_var>=0, eps>0).
        # TODO(synk): negative trained BN gamma would need an explicit in-kernel
        #             scale multiply instead of folding.
        assert bool(jnp.all(scale > 0.0)), "BN scale must be > 0 to fold into W"
        d_in, d_out = w.shape
        w_f = w * scale
        b_f = b * scale
        d_in_p = _round_up(d_in, _LANES)
        d_out_p = _round_up(d_out, _LANES)
        w_p = jnp.zeros((d_in_p, d_out_p), jnp.float32).at[:d_in, :d_out].set(w_f)
        b_p = jnp.zeros((1, d_out_p), jnp.float32).at[:, :d_out].set(b_f)
        s_p = jnp.zeros((1, d_out_p), jnp.float32).at[:, :d_out].set(shift)
        hidden.append((w_p.astype(jnp.bfloat16), b_p, s_p))

    w_out, b_out = params["out"]
    d_in, n_classes = w_out.shape
    d_in_p = _round_up(d_in, _LANES)
    n_cls_p = _round_up(n_classes, _LANES)
    w_out_p = jnp.zeros((d_in_p, n_cls_p), jnp.float32).at[:d_in, :n_classes].set(w_out)
    # Padded class lanes get a huge negative bias so softmax gives them 0.
    # (Stays f32 through the softmax; never cast the logits/bias lower.)
    b_out_p = jnp.full((1, n_cls_p), _NEG_BIG, jnp.float32).at[:, :n_classes].set(b_out)
    return {
        "hidden": hidden,
        "out": (w_out_p.astype(jnp.bfloat16), b_out_p),
        "n_classes": n_classes,
        "n_classes_pad": n_cls_p,
    }


def cifar_mlp_forward(x_nchw, prep, tb=512):
    """Run the fused MLP kernel on prepared (folded/padded/bf16) params."""
    B = x_nchw.shape[0]
    n_inputs = x_nchw.shape[1] * x_nchw.shape[2] * x_nchw.shape[3]
    assert n_inputs % _LANES == 0, "flattened input dim must be lane aligned"
    n_cls_p = prep["n_classes_pad"]

    # Row-major flatten == torch .view(-1, 3*32*32).  Keep f32: the bf16 cast
    # happens inside the kernel so x is read from HBM exactly once.
    x = x_nchw.reshape(B, n_inputs)

    B_pad = _round_up(B, _BATCH_GRAIN)
    if B_pad != B:
        # Only for ragged batch sizes (<= 15 tail rows); row-aligned batches
        # skip this copy entirely.
        x = jnp.pad(x, ((0, B_pad - B), (0, 0)))

    TB = _pick_batch_tile(B_pad, tb)
    grid = _cdiv(B_pad, TB)   # non-dividing TB -> masked partial last block

    flat_inputs = [x]
    for (w, b, shift) in prep["hidden"]:
        flat_inputs += [w, b, shift]
    w_out, b_out = prep["out"]
    flat_inputs += [w_out, b_out]

    # x/out stream per batch tile; all parameters use a constant index_map so
    # they are DMA'd once and stay VMEM-resident across tiles.
    in_specs = [pl.BlockSpec((TB, n_inputs), lambda i: (i, 0))]
    in_specs += [pl.BlockSpec(a.shape, lambda i: (0, 0)) for a in flat_inputs[1:]]
    out_spec = pl.BlockSpec((TB, n_cls_p), lambda i: (i, 0))

    kernel = _make_mlp_kernel(len(prep["hidden"]))

    fn = pl.pallas_call(
        kernel,
        out_shape=jax.ShapeDtypeStruct((B_pad, n_cls_p), jnp.bfloat16),
        grid_spec=pltpu.PrefetchScalarGridSpec(
            num_scalar_prefetch=0,
            grid=(grid,),
            in_specs=in_specs,
            out_specs=out_spec,
        ),
        compiler_params=pltpu.CompilerParams(
            dimension_semantics=("parallel",),   # shard batch tiles across TCs
            vmem_limit_bytes=32 * 1024 * 1024,   # ~26 MiB used even at tb=1024
        ),
    )
    out = fn(*flat_inputs)
    return out[:B, :prep["n_classes"]]


def init_params(key, n_inputs, n_hidden, n_classes):
    """Deterministic parameter init (torch.nn.Linear-style uniform)."""
    params = {"hidden": [], "out": None}
    d_in = n_inputs
    for d_out in n_hidden:
        key, kw, kb = jax.random.split(key, 3)
        bound = 1.0 / jnp.sqrt(d_in)
        w = jax.random.uniform(kw, (d_in, d_out), jnp.float32, -bound, bound)
        b = jax.random.uniform(kb, (1, d_out), jnp.float32, -bound, bound)
        # BatchNorm1d default init + default running stats:
        # gamma=1, beta=0, running_mean=0, running_var=1, eps=1e-5
        eps = 1e-5
        gamma = jnp.ones((1, d_out), jnp.float32)
        beta = jnp.zeros((1, d_out), jnp.float32)
        running_mean = jnp.zeros((1, d_out), jnp.float32)
        running_var = jnp.ones((1, d_out), jnp.float32)
        scale = gamma / jnp.sqrt(running_var + eps)
        shift = beta - running_mean * scale
        params["hidden"].append((w, b, scale, shift))
        d_in = d_out

    key, kw, kb = jax.random.split(key, 3)
    bound = 1.0 / jnp.sqrt(d_in)
    w_out = jax.random.uniform(kw, (d_in, n_classes), jnp.float32, -bound, bound)
    b_out = jax.random.uniform(kb, (1, n_classes), jnp.float32, -bound, bound)
    params["out"] = (w_out, b_out)
    return params


def reference_forward_prepared(x_nchw, prep):
    """Pure-JAX mirror of the kernel's bf16/f32 numerics (tight check)."""
    B = x_nchw.shape[0]
    h = x_nchw.reshape(B, -1).astype(jnp.bfloat16)
    for (w, b, shift) in prep["hidden"]:
        a = jnp.dot(h, w, preferred_element_type=jnp.float32) + b
        a = jnp.maximum(a, 0.0) + shift
        h = a.astype(jnp.bfloat16)
    w_out, b_out = prep["out"]
    logits = jnp.dot(h, w_out, preferred_element_type=jnp.float32) + b_out
    probs = jax.nn.softmax(logits, axis=-1)
    return probs[:, :prep["n_classes"]]


def reference_forward_f32(x_nchw, params):
    """Original full-f32 math (loose sanity check vs bf16 kernel)."""
    B = x_nchw.shape[0]
    h = x_nchw.reshape(B, -1).astype(jnp.float32)
    for (w, b, scale, shift) in params["hidden"]:
        h = jnp.maximum(h @ w + b, 0.0) * scale + shift
    w_out, b_out = params["out"]
    logits = h @ w_out + b_out
    return jax.nn.softmax(logits, axis=-1)


if __name__ == "__main__":
    key = jax.random.PRNGKey(0)
    key, kx, kp = jax.random.split(key, 3)

    B = 2
    n_inputs = 3 * 32 * 32      # forward hard-codes x.view(-1, 3*32*32)
    n_hidden = [128, 64]
    n_classes = 10

    x = jax.random.normal(kx, (B, 3, 32, 32), jnp.float32)
    params = init_params(kp, n_inputs, n_hidden, n_classes)
    prep = prepare_params(params)

    out = cifar_mlp_forward(x, prep)
    out = jax.block_until_ready(out)

    assert out.shape == (B, n_classes)
    assert out.dtype == jnp.bfloat16
    out_f32 = out.astype(jnp.float32)

    # Tight check: same bf16/f32 matmul path as the kernel (output rounded to
    # bf16, so allow ~1 bf16 ulp of slack).
    ref_bf16 = reference_forward_prepared(x, prep)
    assert jnp.allclose(out_f32, ref_bf16, atol=1e-2, rtol=1e-2), "mismatch vs bf16 reference"
    # Loose check: original full-f32 math (bf16 weights cost a little precision).
    ref_f32 = reference_forward_f32(x, params)
    assert jnp.allclose(out_f32, ref_f32, atol=5e-2, rtol=5e-2), "mismatch vs f32 reference"
    # Exact divide in-kernel + bf16 output rounding -> rows sum to 1 within ~2e-3.
    assert jnp.allclose(jnp.sum(out_f32, axis=-1), 1.0, atol=2e-2), "softmax rows must ~sum to 1"

    print("KERNEL_OK")
</pallas_src>

<mosaic_0001>
module attributes {stable_mosaic.version = 11 : i64} {
  func.func @kernel(%arg0: i32, %arg1: memref<16x3072xf32, #tpu.memory_space<vmem>>, %arg2: memref<3072x128xbf16, #tpu.memory_space<vmem>>, %arg3: memref<1x128xf32, #tpu.memory_space<vmem>>, %arg4: memref<1x128xf32, #tpu.memory_space<vmem>>, %arg5: memref<128x128xbf16, #tpu.memory_space<vmem>>, %arg6: memref<1x128xf32, #tpu.memory_space<vmem>>, %arg7: memref<1x128xf32, #tpu.memory_space<vmem>>, %arg8: memref<128x128xbf16, #tpu.memory_space<vmem>>, %arg9: memref<1x128xf32, #tpu.memory_space<vmem>>, %arg10: memref<16x128xbf16, #tpu.memory_space<vmem>>) attributes {dimension_semantics = [#tpu.dimension_semantics<parallel>], iteration_bounds = array<i64: 1>, scalar_prefetch = 0 : i64, scratch_operands = 0 : i64, tpu.core_type = #tpu.core_type<tc>, window_params = [{transform_indices = @transform_0, window_bounds = array<i64: 16, 3072>}, {pipeline_mode = #tpu.pipeline_mode<synchronous>, transform_indices = @transform_1, window_bounds = array<i64: 3072, 128>}, {pipeline_mode = #tpu.pipeline_mode<synchronous>, transform_indices = @transform_2, window_bounds = array<i64: 1, 128>}, {pipeline_mode = #tpu.pipeline_mode<synchronous>, transform_indices = @transform_3, window_bounds = array<i64: 1, 128>}, {pipeline_mode = #tpu.pipeline_mode<synchronous>, transform_indices = @transform_4, window_bounds = array<i64: 128, 128>}, {pipeline_mode = #tpu.pipeline_mode<synchronous>, transform_indices = @transform_5, window_bounds = array<i64: 1, 128>}, {pipeline_mode = #tpu.pipeline_mode<synchronous>, transform_indices = @transform_6, window_bounds = array<i64: 1, 128>}, {pipeline_mode = #tpu.pipeline_mode<synchronous>, transform_indices = @transform_7, window_bounds = array<i64: 128, 128>}, {pipeline_mode = #tpu.pipeline_mode<synchronous>, transform_indices = @transform_8, window_bounds = array<i64: 1, 128>}, {transform_indices = @transform_9, window_bounds = array<i64: 16, 128>}]} {
    %c0 = arith.constant 0 : index
    %c0_0 = arith.constant 0 : index
    %0 = vector.load %arg1[%c0, %c0_0] : memref<16x3072xf32, #tpu.memory_space<vmem>>, vector<16x3072xf32>
    %1 = arith.truncf %0 : vector<16x3072xf32> to vector<16x3072xbf16>
    %c0_1 = arith.constant 0 : index
    %c0_2 = arith.constant 0 : index
    %2 = vector.load %arg2[%c0_1, %c0_2] : memref<3072x128xbf16, #tpu.memory_space<vmem>>, vector<3072x128xbf16>
    %cst = arith.constant dense<0.000000e+00> : vector<16x128xf32>
    %3 = tpu.matmul %1, %2, %cst {dimension_numbers = #tpu.dot_dimension_numbers<[1], [0], [0], [1], [0, 0, 1, 1], [], []>} : vector<16x3072xbf16>, vector<3072x128xbf16>, vector<16x128xf32> -> vector<16x128xf32>
    %c0_3 = arith.constant 0 : index
    %c0_4 = arith.constant 0 : index
    %4 = vector.load %arg3[%c0_3, %c0_4] : memref<1x128xf32, #tpu.memory_space<vmem>>, vector<1x128xf32>
    %5 = vector.broadcast %4 : vector<1x128xf32> to vector<16x128xf32>
    %6 = arith.addf %3, %5 : vector<16x128xf32>
    %cst_5 = arith.constant 0.000000e+00 : f32
    %7 = vector.broadcast %cst_5 : f32 to vector<16x128xf32>
    %8 = arith.maximumf %6, %7 : vector<16x128xf32>
    %c0_6 = arith.constant 0 : index
    %c0_7 = arith.constant 0 : index
    %9 = vector.load %arg4[%c0_6, %c0_7] : memref<1x128xf32, #tpu.memory_space<vmem>>, vector<1x128xf32>
    %10 = vector.broadcast %9 : vector<1x128xf32> to vector<16x128xf32>
    %11 = arith.addf %8, %10 : vector<16x128xf32>
    %12 = arith.truncf %11 : vector<16x128xf32> to vector<16x128xbf16>
    %c0_8 = arith.constant 0 : index
    %c0_9 = arith.constant 0 : index
    %13 = vector.load %arg5[%c0_8, %c0_9] : memref<128x128xbf16, #tpu.memory_space<vmem>>, vector<128x128xbf16>
    %cst_10 = arith.constant dense<0.000000e+00> : vector<16x128xf32>
    %14 = tpu.matmul %12, %13, %cst_10 {dimension_numbers = #tpu.dot_dimension_numbers<[1], [0], [0], [1], [0, 0, 1, 1], [], []>} : vector<16x128xbf16>, vector<128x128xbf16>, vector<16x128xf32> -> vector<16x128xf32>
    %c0_11 = arith.constant 0 : index
    %c0_12 = arith.constant 0 : index
    %15 = vector.load %arg6[%c0_11, %c0_12] : memref<1x128xf32, #tpu.memory_space<vmem>>, vector<1x128xf32>
    %16 = vector.broadcast %15 : vector<1x128xf32> to vector<16x128xf32>
    %17 = arith.addf %14, %16 : vector<16x128xf32>
    %cst_13 = arith.constant 0.000000e+00 : f32
    %18 = vector.broadcast %cst_13 : f32 to vector<16x128xf32>
    %19 = arith.maximumf %17, %18 : vector<16x128xf32>
    %c0_14 = arith.constant 0 : index
    %c0_15 = arith.constant 0 : index
    %20 = vector.load %arg7[%c0_14, %c0_15] : memref<1x128xf32, #tpu.memory_space<vmem>>, vector<1x128xf32>
    %21 = vector.broadcast %20 : vector<1x128xf32> to vector<16x128xf32>
    %22 = arith.addf %19, %21 : vector<16x128xf32>
    %23 = arith.truncf %22 : vector<16x128xf32> to vector<16x128xbf16>
    %c0_16 = arith.constant 0 : index
    %c0_17 = arith.constant 0 : index
    %24 = vector.load %arg8[%c0_16, %c0_17] : memref<128x128xbf16, #tpu.memory_space<vmem>>, vector<128x128xbf16>
    %cst_18 = arith.constant dense<0.000000e+00> : vector<16x128xf32>
    %25 = tpu.matmul %23, %24, %cst_18 {dimension_numbers = #tpu.dot_dimension_numbers<[1], [0], [0], [1], [0, 0, 1, 1], [], []>} : vector<16x128xbf16>, vector<128x128xbf16>, vector<16x128xf32> -> vector<16x128xf32>
    %c0_19 = arith.constant 0 : index
    %c0_20 = arith.constant 0 : index
    %26 = vector.load %arg9[%c0_19, %c0_20] : memref<1x128xf32, #tpu.memory_space<vmem>>, vector<1x128xf32>
    %27 = vector.broadcast %26 : vector<1x128xf32> to vector<16x128xf32>
    %28 = arith.addf %25, %27 : vector<16x128xf32>
    %cst_21 = arith.constant dense<0xFF800000> : vector<16xf32>
    %29 = vector.multi_reduction <maximumf>, %28, %cst_21 [1] : vector<16x128xf32> to vector<16xf32>
    %30 = vector.shape_cast %29 : vector<16xf32> to vector<16x1xf32>
    %31 = vector.broadcast %30 : vector<16x1xf32> to vector<16x128xf32>
    %32 = arith.subf %28, %31 : vector<16x128xf32>
    %33 = math.exp %32 : vector<16x128xf32>
    %cst_22 = arith.constant dense<0.000000e+00> : vector<16xf32>
    %34 = vector.multi_reduction <add>, %33, %cst_22 [1] : vector<16x128xf32> to vector<16xf32>
    %35 = vector.shape_cast %34 : vector<16xf32> to vector<16x1xf32>
    %36 = vector.broadcast %35 : vector<16x1xf32> to vector<16x128xf32>
    %37 = arith.divf %33, %36 : vector<16x128xf32>
    %38 = arith.truncf %37 : vector<16x128xf32> to vector<16x128xbf16>
    %c0_23 = arith.constant 0 : index
    %c0_24 = arith.constant 0 : index
    %39 = vector.load %arg10[%c0_23, %c0_24] : memref<16x128xbf16, #tpu.memory_space<vmem>>, vector<16x128xbf16>
    tpu.vector_store %arg10[%c0_23, %c0_24], %38 {strides = array<i32>} : memref<16x128xbf16, #tpu.memory_space<vmem>>, vector<16x128xbf16>,
    return
  }
  func.func @transform_0(%arg0: i32) -> (i32, i32) {
    %c0_i32 = arith.constant 0 : i32
    %c0_i32_0 = arith.constant 0 : i32
    return %arg0, %c0_i32 : i32, i32
  }
  func.func @transform_1(%arg0: i32) -> (i32, i32) {
    %c0_i32 = arith.constant 0 : i32
    %c0_i32_0 = arith.constant 0 : i32
    %c0_i32_1 = arith.constant 0 : i32
    return %c0_i32, %c0_i32_0 : i32, i32
  }
  func.func @transform_2(%arg0: i32) -> (i32, i32) {
    %c0_i32 = arith.constant 0 : i32
    %c0_i32_0 = arith.constant 0 : i32
    %c0_i32_1 = arith.constant 0 : i32
    return %c0_i32, %c0_i32_0 : i32, i32
  }
  func.func @transform_3(%arg0: i32) -> (i32, i32) {
    %c0_i32 = arith.constant 0 : i32
    %c0_i32_0 = arith.constant 0 : i32
    %c0_i32_1 = arith.constant 0 : i32
    return %c0_i32, %c0_i32_0 : i32, i32
  }
  func.func @transform_4(%arg0: i32) -> (i32, i32) {
    %c0_i32 = arith.constant 0 : i32
    %c0_i32_0 = arith.constant 0 : i32
    %c0_i32_1 = arith.constant 0 : i32
    return %c0_i32, %c0_i32_0 : i32, i32
  }
  func.func @transform_5(%arg0: i32) -> (i32, i32) {
    %c0_i32 = arith.constant 0 : i32
    %c0_i32_0 = arith.constant 0 : i32
    %c0_i32_1 = arith.constant 0 : i32
    return %c0_i32, %c0_i32_0 : i32, i32
  }
  func.func @transform_6(%arg0: i32) -> (i32, i32) {
    %c0_i32 = arith.constant 0 : i32
    %c0_i32_0 = arith.constant 0 : i32
    %c0_i32_1 = arith.constant 0 : i32
    return %c0_i32, %c0_i32_0 : i32, i32
  }
  func.func @transform_7(%arg0: i32) -> (i32, i32) {
    %c0_i32 = arith.constant 0 : i32
    %c0_i32_0 = arith.constant 0 : i32
    %c0_i32_1 = arith.constant 0 : i32
    return %c0_i32, %c0_i32_0 : i32, i32
  }
  func.func @transform_8(%arg0: i32) -> (i32, i32) {
    %c0_i32 = arith.constant 0 : i32
    %c0_i32_0 = arith.constant 0 : i32
    %c0_i32_1 = arith.constant 0 : i32
    return %c0_i32, %c0_i32_0 : i32, i32
  }
  func.func @transform_9(%arg0: i32) -> (i32, i32) {
    %c0_i32 = arith.constant 0 : i32
    %c0_i32_0 = arith.constant 0 : i32
    return %arg0, %c0_i32 : i32, i32
  }
}

</mosaic_0001>

<llo_original>
// kernel: tpu_custom_call.1
$region0: #{tpu_custom_call.1}
  #allocation0 [shape = 'u32[]', space=smem, size = 0x4, offset = 0x4, fixed_abs, tag = 'smem constant byte address 0x4 - core index']
  #allocation1 [shape = 'u32[72,128]{1,0:T(1,128)}', space=vmem, size = 0x9000, scoped, tag = 'internal scratch']
  %s0 = inlined_call_operand.hbm [shape: f32[16,3072], index: 0, kind: input, shape index: {}]
  %s1 = inlined_call_operand.hbm [shape: bf16[3072,128], index: 1, kind: input, shape index: {}]
  %s2 = inlined_call_operand.vmem [shape: f32[1,128], index: 2, kind: input, shape index: {}]
  %s3 = inlined_call_operand.vmem [shape: f32[1,128], index: 3, kind: input, shape index: {}]
  %s4 = inlined_call_operand.hbm [shape: bf16[128,128], index: 4, kind: input, shape index: {}]
  %s5 = inlined_call_operand.vmem [shape: f32[1,128], index: 5, kind: input, shape index: {}]
  %s6 = inlined_call_operand.vmem [shape: f32[1,128], index: 6, kind: input, shape index: {}]
  %s7 = inlined_call_operand.hbm [shape: bf16[128,128], index: 7, kind: input, shape index: {}]
  %s8 = inlined_call_operand.vmem [shape: f32[1,128], index: 8, kind: input, shape index: {}]
  %s9 = inlined_call_operand.hbm [shape: bf16[16,128], index: 9, kind: output, shape index: {}]
  %s10 = sld [smem:[#allocation0]]
  $region62: #{tpu_custom_call.1} parent=0
    _
  %s12 = ssub.s32 1, %s10
  %s13 = scalar_select 0, %s12, %s10
  $region1: #{tpu_custom_call.1} parent=0
    #allocation2 [shape = 'u8[196608]{0}', space=vmem, size = 0x30000, scoped, tag = 'input window, operand 0, single buffered']
    #allocation3 [shape = 's32[1]{0}', space=sflag, size = 0x4, scoped, tag = 'scoped memory for tpu_custom_call.1']
    #allocation4 [shape = 's32[1]{0}', space=sflag, size = 0x4, scoped, tag = 'scoped memory for tpu_custom_call.1']
    #allocation5 [shape = 'u8[786432]{0}', space=vmem, size = 0xc0000, scoped, tag = 'input window, operand 1, single buffered']
    #allocation6 [shape = 's32[1]{0}', space=sflag, size = 0x4, scoped, tag = 'scoped memory for tpu_custom_call.1']
    #allocation7 [shape = 'u8[32768]{0}', space=vmem, size = 0x8000, scoped, tag = 'input window, operand 4, single buffered']
    #allocation8 [shape = 'u8[32768]{0}', space=vmem, size = 0x8000, scoped, tag = 'input window, operand 7, single buffered']
    #allocation9 [shape = 's32[1]{0}', space=sflag, size = 0x4, scoped, tag = 'scoped memory for tpu_custom_call.1']
    #allocation10 [shape = 'u8[4096]{0}', space=vmem, size = 0x1000, scoped, tag = 'output window, operand 0, single buffered']
    %14 = vsyncpa [#allocation3], 0
    %15 = vsyncpa [#allocation6], 0
    %16 = vsyncpa [#allocation9], 0
    %17 = vsyncpa [#allocation4], 0
    // Predicated region
    $region2: #{tpu_custom_call.1} parent=1 // pred_check
      _
    $region3: #{tpu_custom_call.1} parent=1 // pred_check_branch
      %19 = sbr.rel (0) target = $region5
    $region4: #{tpu_custom_call.1} parent=1 // pred_region
      %21 = vsyncadd [#allocation3], 0
      %s22 = sshll.u32 %s0, 4
      %s23 = int_to_ptr.hbm [resolvable:$true] %s22
      %s24 = sshll.u32 [#allocation2], 4
      %s25 = int_to_ptr.vmem [resolvable:$true] %s24
      %30 = dma.hbm_to_vmem [thread:$0]  %s23, 6144, %s25, [#allocation3], 3072, 3072, 192
    $region5: #{tpu_custom_call.1} parent=1 // pred_fallthru
      _
    // Predicated region
    $region6: #{tpu_custom_call.1} parent=1 // pred_check
      _
    $region7: #{tpu_custom_call.1} parent=1 // pred_check_branch
      %32 = sbr.rel (0) target = $region9
    $region8: #{tpu_custom_call.1} parent=1 // pred_region
      %34 = vsyncadd [#allocation6], 0
      %s35 = sshll.u32 %s1, 4
      %s36 = int_to_ptr.hbm [resolvable:$true] %s35
      %s37 = sshll.u32 [#allocation5], 4
      %s38 = int_to_ptr.vmem [resolvable:$true] %s37
      %43 = dma.hbm_to_vmem [thread:$0]  %s36, 24576, %s38, [#allocation6], 64, 64, 4
    $region9: #{tpu_custom_call.1} parent=1 // pred_fallthru
      _
    // Predicated region
    $region10: #{tpu_custom_call.1} parent=1 // pred_check
      _
    $region11: #{tpu_custom_call.1} parent=1 // pred_check_branch
      %45 = sbr.rel (0) target = $region13
    $region12: #{tpu_custom_call.1} parent=1 // pred_region
      _
    $region13: #{tpu_custom_call.1} parent=1 // pred_fallthru
      _
    // Predicated region
    $region14: #{tpu_custom_call.1} parent=1 // pred_check
      _
    $region15: #{tpu_custom_call.1} parent=1 // pred_check_branch
      %47 = sbr.rel (0) target = $region17
    $region16: #{tpu_custom_call.1} parent=1 // pred_region
      _
    $region17: #{tpu_custom_call.1} parent=1 // pred_fallthru
      _
    // Predicated region
    $region18: #{tpu_custom_call.1} parent=1 // pred_check
      _
    $region19: #{tpu_custom_call.1} parent=1 // pred_check_branch
      %49 = sbr.rel (0) target = $region21
    $region20: #{tpu_custom_call.1} parent=1 // pred_region
      %51 = vsyncadd [#allocation6], 0
      %s52 = sshll.u32 %s4, 4
      %s53 = int_to_ptr.hbm [resolvable:$true] %s52
      %s54 = sshll.u32 [#allocation7], 4
      %s55 = int_to_ptr.vmem [resolvable:$true] %s54
      %60 = dma.hbm_to_vmem [thread:$0]  %s53, 1024, %s55, [#allocation6], 64, 64, 4
    $region21: #{tpu_custom_call.1} parent=1 // pred_fallthru
      _
    // Predicated region
    $region22: #{tpu_custom_call.1} parent=1 // pred_check
      _
    $region23: #{tpu_custom_call.1} parent=1 // pred_check_branch
      %62 = sbr.rel (0) target = $region25
    $region24: #{tpu_custom_call.1} parent=1 // pred_region
      _
    $region25: #{tpu_custom_call.1} parent=1 // pred_fallthru
      _
    // Predicated region
    $region26: #{tpu_custom_call.1} parent=1 // pred_check
      _
    $region27: #{tpu_custom_call.1} parent=1 // pred_check_branch
      %64 = sbr.rel (0) target = $region29
    $region28: #{tpu_custom_call.1} parent=1 // pred_region
      _
    $region29: #{tpu_custom_call.1} parent=1 // pred_fallthru
      _
    // Predicated region
    $region30: #{tpu_custom_call.1} parent=1 // pred_check
      _
    $region31: #{tpu_custom_call.1} parent=1 // pred_check_branch
      %66 = sbr.rel (0) target = $region33
    $region32: #{tpu_custom_call.1} parent=1 // pred_region
      %68 = vsyncadd [#allocation9], 0
      %s69 = sshll.u32 %s7, 4
      %s70 = int_to_ptr.hbm [resolvable:$true] %s69
      %s71 = sshll.u32 [#allocation8], 4
      %s72 = int_to_ptr.vmem [resolvable:$true] %s71
      %77 = dma.hbm_to_vmem [thread:$0]  %s70, 1024, %s72, [#allocation9], 64, 64, 4
    $region33: #{tpu_custom_call.1} parent=1 // pred_fallthru
      _
    // Predicated region
    $region34: #{tpu_custom_call.1} parent=1 // pred_check
      _
    $region35: #{tpu_custom_call.1} parent=1 // pred_check_branch
      %79 = sbr.rel (0) target = $region37
    $region36: #{tpu_custom_call.1} parent=1 // pred_region
      _
    $region37: #{tpu_custom_call.1} parent=1 // pred_fallthru
      _
    // Predicated region
    $region38: #{tpu_custom_call.1} parent=1 // pred_check
      _
    $region39: #{tpu_custom_call.1} parent=1 // pred_check_branch
      %81 = sbr.rel (0) target = $region41
    $region40: #{tpu_custom_call.1} parent=1 // pred_region
      %83 = dma.done [#allocation3], 6144
    $region41: #{tpu_custom_call.1} parent=1 // pred_fallthru
      _
    // Predicated region
    $region42: #{tpu_custom_call.1} parent=1 // pred_check
      _
    $region43: #{tpu_custom_call.1} parent=1 // pred_check_branch
      %85 = sbr.rel (0) target = $region45
    $region44: #{tpu_custom_call.1} parent=1 // pred_region
      %87 = dma.done [#allocation6], 24576
    $region45: #{tpu_custom_call.1} parent=1 // pred_fallthru
      _
    // Predicated region
    $region46: #{tpu_custom_call.1} parent=1 // pred_check
      _
    $region47: #{tpu_custom_call.1} parent=1 // pred_check_branch
      %89 = sbr.rel (0) target = $region49
    $region48: #{tpu_custom_call.1} parent=1 // pred_region
      %91 = dma.done [#allocation6], 1024
    $region49: #{tpu_custom_call.1} parent=1 // pred_fallthru
      _
    // Predicated region
    $region50: #{tpu_custom_call.1} parent=1 // pred_check
      _
    $region51: #{tpu_custom_call.1} parent=1 // pred_check_branch
      %93 = sbr.rel (0) target = $region53
    $region52: #{tpu_custom_call.1} parent=1 // pred_region
      %95 = dma.done [#allocation9], 1024
    $region53: #{tpu_custom_call.1} parent=1 // pred_fallthru
      _
    %v96 = vld [vmem:[#allocation2] sm:$0xff]
    %v97 = vld [vmem:[#allocation2 + $0x8] sm:$0xff]
    %v98 = vld [vmem:[#allocation2 + $0x10] sm:$0xff]
    %v99 = vld [vmem:[#allocation2 + $0x18] sm:$0xff]
    %v100 = vld [vmem:[#allocation2 + $0x20] sm:$0xff]
    %v101 = vld [vmem:[#allocation2 + $0x28] sm:$0xff]
    %v102 = vld [vmem:[#allocation2 + $0x30] sm:$0xff]
    %v103 = vld [vmem:[#allocation2 + $0x38] sm:$0xff]
    %v104 = vld [vmem:[#allocation2 + $0x40] sm:$0xff]
    %v105 = vld [vmem:[#allocation2 + $0x48] sm:$0xff]
    %v106 = vld [vmem:[#allocation2 + $0x50] sm:$0xff]
    %v107 = vld [vmem:[#allocation2 + $0x58] sm:$0xff]
    %v108 = vld [vmem:[#allocation2 + $0x60] sm:$0xff]
    %v109 = vld [vmem:[#allocation2 + $0x68] sm:$0xff]
    %v110 = vld [vmem:[#allocation2 + $0x70] sm:$0xff]
    %v111 = vld [vmem:[#allocation2 + $0x78] sm:$0xff]
    %v112 = vld [vmem:[#allocation2 + $0x80] sm:$0xff]
    %v113 = vld [vmem:[#allocation2 + $0x88] sm:$0xff]
    %v114 = vld [vmem:[#allocation2 + $0x90] sm:$0xff]
    %v115 = vld [vmem:[#allocation2 + $0x98] sm:$0xff]
    %v116 = vld [vmem:[#allocation2 + $0xa0] sm:$0xff]
    %v117 = vld [vmem:[#allocation2 + $0xa8] sm:$0xff]
    %v118 = vld [vmem:[#allocation2 + $0xb0] sm:$0xff]
    %v119 = vld [vmem:[#allocation2 + $0xb8] sm:$0xff]
    %v120 = vld [vmem:[#allocation2 + $0xc0] sm:$0xff]
    %v121 = vld [vmem:[#allocation2 + $0xc8] sm:$0xff]
    %v122 = vld [vmem:[#allocation2 + $0xd0] sm:$0xff]
    %v123 = vld [vmem:[#allocation2 + $0xd8] sm:$0xff]
    %v124 = vld [vmem:[#allocation2 + $0xe0] sm:$0xff]
    %v125 = vld [vmem:[#allocation2 + $0xe8] sm:$0xff]
    %v126 = vld [vmem:[#allocation2 + $0xf0] sm:$0xff]
    %v127 = vld [vmem:[#allocation2 + $0xf8] sm:$0xff]
    %v128 = vld [vmem:[#allocation2 + $0x100] sm:$0xff]
    %v129 = vld [vmem:[#allocation2 + $0x108] sm:$0xff]
    %v130 = vld [vmem:[#allocation2 + $0x110] sm:$0xff]
    %v131 = vld [vmem:[#allocation2 + $0x118] sm:$0xff]
    %v132 = vld [vmem:[#allocation2 + $0x120] sm:$0xff]
    %v133 = vld [vmem:[#allocation2 + $0x128] sm:$0xff]
    %v134 = vld [vmem:[#allocation2 + $0x130] sm:$0xff]
    %v135 = vld [vmem:[#allocation2 + $0x138] sm:$0xff]
    %v136 = vld [vmem:[#allocation2 + $0x140] sm:$0xff]
    %v137 = vld [vmem:[#allocation2 + $0x148] sm:$0xff]
    %v138 = vld [vmem:[#allocation2 + $0x150] sm:$0xff]
    %v139 = vld [vmem:[#allocation2 + $0x158] sm:$0xff]
    %v140 = vld [vmem:[#allocation2 + $0x160] sm:$0xff]
    %v141 = vld [vmem:[#allocation2 + $0x168] sm:$0xff]
    %v142 = vld [vmem:[#allocation2 + $0x170] sm:$0xff]
    %v143 = vld [vmem:[#allocation2 + $0x178] sm:$0xff]
    %v144 = vpack.c.bf16 %v120, %v96
    %v145 = vpack.c.bf16 %v121, %v97
    %v146 = vpack.c.bf16 %v122, %v98
    %v147 = vpack.c.bf16 %v123, %v99
    %v148 = vpack.c.bf16 %v124, %v100
    %v149 = vpack.c.bf16 %v125, %v101
    %v150 = vpack.c.bf16 %v126, %v102
    %v151 = vpack.c.bf16 %v127, %v103
    %v152 = vpack.c.bf16 %v128, %v104
    %v153 = vpack.c.bf16 %v129, %v105
    %v154 = vpack.c.bf16 %v130, %v106
    %v155 = vpack.c.bf16 %v131, %v107
    %v156 = vpack.c.bf16 %v132, %v108
    %v157 = vpack.c.bf16 %v133, %v109
    %v158 = vpack.c.bf16 %v134, %v110
    %v159 = vpack.c.bf16 %v135, %v111
    %v160 = vpack.c.bf16 %v136, %v112
    %v161 = vpack.c.bf16 %v137, %v113
    %v162 = vpack.c.bf16 %v138, %v114
    %v163 = vpack.c.bf16 %v139, %v115
    %v164 = vpack.c.bf16 %v140, %v116
    %v165 = vpack.c.bf16 %v141, %v117
    %v166 = vpack.c.bf16 %v142, %v118
    %v167 = vpack.c.bf16 %v143, %v119
    %v168 = vld [vmem:[#allocation5] sm:$0xf]
    %v169 = vld [vmem:[#allocation5 + $0x4] sm:$0xf]
    %v170 = vld [vmem:[#allocation5 + $0x8] sm:$0xf]
    %v171 = vld [vmem:[#allocation5 + $0xc] sm:$0xf]
    %v172 = vld [vmem:[#allocation5 + $0x10] sm:$0xf]
    %v173 = vld [vmem:[#allocation5 + $0x14] sm:$0xf]
    %v174 = vld [vmem:[#allocation5 + $0x18] sm:$0xf]
    %v175 = vld [vmem:[#allocation5 + $0x1c] sm:$0xf]
    %v176 = vld [vmem:[#allocation5 + $0x20] sm:$0xf]
    %v177 = vld [vmem:[#allocation5 + $0x24] sm:$0xf]
    %v178 = vld [vmem:[#allocation5 + $0x28] sm:$0xf]
    %v179 = vld [vmem:[#allocation5 + $0x2c] sm:$0xf]
    %v180 = vld [vmem:[#allocation5 + $0x30] sm:$0xf]
    %v181 = vld [vmem:[#allocation5 + $0x34] sm:$0xf]
    %v182 = vld [vmem:[#allocation5 + $0x38] sm:$0xf]
    %v183 = vld [vmem:[#allocation5 + $0x3c] sm:$0xf]
    %v184 = vld [vmem:[#allocation5 + $0x40] sm:$0xf]
    %v185 = vld [vmem:[#allocation5 + $0x44] sm:$0xf]
    %v186 = vld [vmem:[#allocation5 + $0x48] sm:$0xf]
    %v187 = vld [vmem:[#allocation5 + $0x4c] sm:$0xf]
    %v188 = vld [vmem:[#allocation5 + $0x50] sm:$0xf]
    %v189 = vld [vmem:[#allocation5 + $0x54] sm:$0xf]
    %v190 = vld [vmem:[#allocation5 + $0x58] sm:$0xf]
    %v191 = vld [vmem:[#allocation5 + $0x5c] sm:$0xf]
    %v192 = vld [vmem:[#allocation5 + $0x60] sm:$0xf]
    %v193 = vld [vmem:[#allocation5 + $0x64] sm:$0xf]
    %v194 = vld [vmem:[#allocation5 + $0x68] sm:$0xf]
    %v195 = vld [vmem:[#allocation5 + $0x6c] sm:$0xf]
    %v196 = vld [vmem:[#allocation5 + $0x70] sm:$0xf]
    %v197 = vld [vmem:[#allocation5 + $0x74] sm:$0xf]
    %v198 = vld [vmem:[#allocation5 + $0x78] sm:$0xf]
    %v199 = vld [vmem:[#allocation5 + $0x7c] sm:$0xf]
    %v200 = vld [vmem:[#allocation5 + $0x80] sm:$0xf]
    %v201 = vld [vmem:[#allocation5 + $0x84] sm:$0xf]
    %v202 = vld [vmem:[#allocation5 + $0x88] sm:$0xf]
    %v203 = vld [vmem:[#allocation5 + $0x8c] sm:$0xf]
    %v204 = vld [vmem:[#allocation5 + $0x90] sm:$0xf]
    %v205 = vld [vmem:[#allocation5 + $0x94] sm:$0xf]
    %v206 = vld [vmem:[#allocation5 + $0x98] sm:$0xf]
    %v207 = vld [vmem:[#allocation5 + $0x9c] sm:$0xf]
    %v208 = vld [vmem:[#allocation5 + $0xa0] sm:$0xf]
    %v209 = vld [vmem:[#allocation5 + $0xa4] sm:$0xf]
    %v210 = vld [vmem:[#allocation5 + $0xa8] sm:$0xf]
    %v211 = vld [vmem:[#allocation5 + $0xac] sm:$0xf]
    %v212 = vld [vmem:[#allocation5 + $0xb0] sm:$0xf]
    %v213 = vld [vmem:[#allocation5 + $0xb4] sm:$0xf]
    %v214 = vld [vmem:[#allocation5 + $0xb8] sm:$0xf]
    %v215 = vld [vmem:[#allocation5 + $0xbc] sm:$0xf]
    %v216 = vld [vmem:[#allocation5 + $0xc0] sm:$0xf]
    %v217 = vld [vmem:[#allocation5 + $0xc4] sm:$0xf]
    %v218 = vld [vmem:[#allocation5 + $0xc8] sm:$0xf]
    %v219 = vld [vmem:[#allocation5 + $0xcc] sm:$0xf]
    %v220 = vld [vmem:[#allocation5 + $0xd0] sm:$0xf]
    %v221 = vld [vmem:[#allocation5 + $0xd4] sm:$0xf]
    %v222 = vld [vmem:[#allocation5 + $0xd8] sm:$0xf]
    %v223 = vld [vmem:[#allocation5 + $0xdc] sm:$0xf]
    %v224 = vld [vmem:[#allocation5 + $0xe0] sm:$0xf]
    %v225 = vld [vmem:[#allocation5 + $0xe4] sm:$0xf]
    %v226 = vld [vmem:[#allocation5 + $0xe8] sm:$0xf]
    %v227 = vld [vmem:[#allocation5 + $0xec] sm:$0xf]
    %v228 = vld [vmem:[#allocation5 + $0xf0] sm:$0xf]
    %v229 = vld [vmem:[#allocation5 + $0xf4] sm:$0xf]
    %v230 = vld [vmem:[#allocation5 + $0xf8] sm:$0xf]
    %v231 = vld [vmem:[#allocation5 + $0xfc] sm:$0xf]
    %v232 = vld [vmem:[#allocation5 + $0x100] sm:$0xf]
    %v233 = vld [vmem:[#allocation5 + $0x104] sm:$0xf]
    %v234 = vld [vmem:[#allocation5 + $0x108] sm:$0xf]
    %v235 = vld [vmem:[#allocation5 + $0x10c] sm:$0xf]
    %v236 = vld [vmem:[#allocation5 + $0x110] sm:$0xf]
    %v237 = vld [vmem:[#allocation5 + $0x114] sm:$0xf]
    %v238 = vld [vmem:[#allocation5 + $0x118] sm:$0xf]
    %v239 = vld [vmem:[#allocation5 + $0x11c] sm:$0xf]
    %v240 = vld [vmem:[#allocation5 + $0x120] sm:$0xf]
    %v241 = vld [vmem:[#allocation5 + $0x124] sm:$0xf]
    %v242 = vld [vmem:[#allocation5 + $0x128] sm:$0xf]
    %v243 = vld [vmem:[#allocation5 + $0x12c] sm:$0xf]
    %v244 = vld [vmem:[#allocation5 + $0x130] sm:$0xf]
    %v245 = vld [vmem:[#allocation5 + $0x134] sm:$0xf]
    %v246 = vld [vmem:[#allocation5 + $0x138] sm:$0xf]
    %v247 = vld [vmem:[#allocation5 + $0x13c] sm:$0xf]
    %v248 = vld [vmem:[#allocation5 + $0x140] sm:$0xf]
    %v249 = vld [vmem:[#allocation5 + $0x144] sm:$0xf]
    %v250 = vld [vmem:[#allocation5 + $0x148] sm:$0xf]
    %v251 = vld [vmem:[#allocation5 + $0x14c] sm:$0xf]
    %v252 = vld [vmem:[#allocation5 + $0x150] sm:$0xf]
    %v253 = vld [vmem:[#allocation5 + $0x154] sm:$0xf]
    %v254 = vld [vmem:[#allocation5 + $0x158] sm:$0xf]
    %v255 = vld [vmem:[#allocation5 + $0x15c] sm:$0xf]
    %v256 = vld [vmem:[#allocation5 + $0x160] sm:$0xf]
    %v257 = vld [vmem:[#allocation5 + $0x164] sm:$0xf]
    %v258 = vld [vmem:[#allocation5 + $0x168] sm:$0xf]
    %v259 = vld [vmem:[#allocation5 + $0x16c] sm:$0xf]
    %v260 = vld [vmem:[#allocation5 + $0x170] sm:$0xf]
    %v261 = vld [vmem:[#allocation5 + $0x174] sm:$0xf]
    %v262 = vld [vmem:[#allocation5 + $0x178] sm:$0xf]
    %v263 = vld [vmem:[#allocation5 + $0x17c] sm:$0xf]
    %v264 = vld [vmem:[#allocation5 + $0x180] sm:$0xf]
    %v265 = vld [vmem:[#allocation5 + $0x184] sm:$0xf]
    %v266 = vld [vmem:[#allocation5 + $0x188] sm:$0xf]
    %v267 = vld [vmem:[#allocation5 + $0x18c] sm:$0xf]
    %v268 = vld [vmem:[#allocation5 + $0x190] sm:$0xf]
    %v269 = vld [vmem:[#allocation5 + $0x194] sm:$0xf]
    %v270 = vld [vmem:[#allocation5 + $0x198] sm:$0xf]
    %v271 = vld [vmem:[#allocation5 + $0x19c] sm:$0xf]
    %v272 = vld [vmem:[#allocation5 + $0x1a0] sm:$0xf]
    %v273 = vld [vmem:[#allocation5 + $0x1a4] sm:$0xf]
    %v274 = vld [vmem:[#allocation5 + $0x1a8] sm:$0xf]
    %v275 = vld [vmem:[#allocation5 + $0x1ac] sm:$0xf]
    %v276 = vld [vmem:[#allocation5 + $0x1b0] sm:$0xf]
    %v277 = vld [vmem:[#allocation5 + $0x1b4] sm:$0xf]
    %v278 = vld [vmem:[#allocation5 + $0x1b8] sm:$0xf]
    %v279 = vld [vmem:[#allocation5 + $0x1bc] sm:$0xf]
    %v280 = vld [vmem:[#allocation5 + $0x1c0] sm:$0xf]
    %v281 = vld [vmem:[#allocation5 + $0x1c4] sm:$0xf]
    %v282 = vld [vmem:[#allocation5 + $0x1c8] sm:$0xf]
    %v283 = vld [vmem:[#allocation5 + $0x1cc] sm:$0xf]
    %v284 = vld [vmem:[#allocation5 + $0x1d0] sm:$0xf]
    %v285 = vld [vmem:[#allocation5 + $0x1d4] sm:$0xf]
    %v286 = vld [vmem:[#allocation5 + $0x1d8] sm:$0xf]
    %v287 = vld [vmem:[#allocation5 + $0x1dc] sm:$0xf]
    %v288 = vld [vmem:[#allocation5 + $0x1e0] sm:$0xf]
    %v289 = vld [vmem:[#allocation5 + $0x1e4] sm:$0xf]
    %v290 = vld [vmem:[#allocation5 + $0x1e8] sm:$0xf]
    %v291 = vld [vmem:[#allocation5 + $0x1ec] sm:$0xf]
    %v292 = vld [vmem:[#allocation5 + $0x1f0] sm:$0xf]
    %v293 = vld [vmem:[#allocation5 + $0x1f4] sm:$0xf]
    %v294 = vld [vmem:[#allocation5 + $0x1f8] sm:$0xf]
    %v295 = vld [vmem:[#allocation5 + $0x1fc] sm:$0xf]
    %v296 = vld [vmem:[#allocation5 + $0x200] sm:$0xf]
    %v297 = vld [vmem:[#allocation5 + $0x204] sm:$0xf]
    %v298 = vld [vmem:[#allocation5 + $0x208] sm:$0xf]
    %v299 = vld [vmem:[#allocation5 + $0x20c] sm:$0xf]
    %v300 = vld [vmem:[#allocation5 + $0x210] sm:$0xf]
    %v301 = vld [vmem:[#allocation5 + $0x214] sm:$0xf]
    %v302 = vld [vmem:[#allocation5 + $0x218] sm:$0xf]
    %v303 = vld [vmem:[#allocation5 + $0x21c] sm:$0xf]
    %v304 = vld [vmem:[#allocation5 + $0x220] sm:$0xf]
    %v305 = vld [vmem:[#allocation5 + $0x224] sm:$0xf]
    %v306 = vld [vmem:[#allocation5 + $0x228] sm:$0xf]
    %v307 = vld [vmem:[#allocation5 + $0x22c] sm:$0xf]
    %v308 = vld [vmem:[#allocation5 + $0x230] sm:$0xf]
    %v309 = vld [vmem:[#allocation5 + $0x234] sm:$0xf]
    %v310 = vld [vmem:[#allocation5 + $0x238] sm:$0xf]
    %v311 = vld [vmem:[#allocation5 + $0x23c] sm:$0xf]
    %v312 = vld [vmem:[#allocation5 + $0x240] sm:$0xf]
    %v313 = vld [vmem:[#allocation5 + $0x244] sm:$0xf]
    %v314 = vld [vmem:[#allocation5 + $0x248] sm:$0xf]
    %v315 = vld [vmem:[#allocation5 + $0x24c] sm:$0xf]
    %v316 = vld [vmem:[#allocation5 + $0x250] sm:$0xf]
    %v317 = vld [vmem:[#allocation5 + $0x254] sm:$0xf]
    %v318 = vld [vmem:[#allocation5 + $0x258] sm:$0xf]
    %v319 = vld [vmem:[#allocation5 + $0x25c] sm:$0xf]
    %v320 = vld [vmem:[#allocation5 + $0x260] sm:$0xf]
    %v321 = vld [vmem:[#allocation5 + $0x264] sm:$0xf]
    %v322 = vld [vmem:[#allocation5 + $0x268] sm:$0xf]
    %v323 = vld [vmem:[#allocation5 + $0x26c] sm:$0xf]
    %v324 = vld [vmem:[#allocation5 + $0x270] sm:$0xf]
    %v325 = vld [vmem:[#allocation5 + $0x274] sm:$0xf]
    %v326 = vld [vmem:[#allocation5 + $0x278] sm:$0xf]
    %v327 = vld [vmem:[#allocation5 + $0x27c] sm:$0xf]
    %v328 = vld [vmem:[#allocation5 + $0x280] sm:$0xf]
    %v329 = vld [vmem:[#allocation5 + $0x284] sm:$0xf]
    %v330 = vld [vmem:[#allocation5 + $0x288] sm:$0xf]
    %v331 = vld [vmem:[#allocation5 + $0x28c] sm:$0xf]
    %v332 = vld [vmem:[#allocation5 + $0x290] sm:$0xf]
    %v333 = vld [vmem:[#allocation5 + $0x294] sm:$0xf]
    %v334 = vld [vmem:[#allocation5 + $0x298] sm:$0xf]
    %v335 = vld [vmem:[#allocation5 + $0x29c] sm:$0xf]
    %v336 = vld [vmem:[#allocation5 + $0x2a0] sm:$0xf]
    %v337 = vld [vmem:[#allocation5 + $0x2a4] sm:$0xf]
    %v338 = vld [vmem:[#allocation5 + $0x2a8] sm:$0xf]
    %v339 = vld [vmem:[#allocation5 + $0x2ac] sm:$0xf]
    %v340 = vld [vmem:[#allocation5 + $0x2b0] sm:$0xf]
    %v341 = vld [vmem:[#allocation5 + $0x2b4] sm:$0xf]
    %v342 = vld [vmem:[#allocation5 + $0x2b8] sm:$0xf]
    %v343 = vld [vmem:[#allocation5 + $0x2bc] sm:$0xf]
    %v344 = vld [vmem:[#allocation5 + $0x2c0] sm:$0xf]
    %v345 = vld [vmem:[#allocation5 + $0x2c4] sm:$0xf]
    %v346 = vld [vmem:[#allocation5 + $0x2c8] sm:$0xf]
    %v347 = vld [vmem:[#allocation5 + $0x2cc] sm:$0xf]
    %v348 = vld [vmem:[#allocation5 + $0x2d0] sm:$0xf]
    %v349 = vld [vmem:[#allocation5 + $0x2d4] sm:$0xf]
    %v350 = vld [vmem:[#allocation5 + $0x2d8] sm:$0xf]
    %v351 = vld [vmem:[#allocation5 + $0x2dc] sm:$0xf]
    %v352 = vld [vmem:[#allocation5 + $0x2e0] sm:$0xf]
    %v353 = vld [vmem:[#allocation5 + $0x2e4] sm:$0xf]
    %v354 = vld [vmem:[#allocation5 + $0x2e8] sm:$0xf]
    %v355 = vld [vmem:[#allocation5 + $0x2ec] sm:$0xf]
    %v356 = vld [vmem:[#allocation5 + $0x2f0] sm:$0xf]
    %v357 = vld [vmem:[#allocation5 + $0x2f4] sm:$0xf]
    %v358 = vld [vmem:[#allocation5 + $0x2f8] sm:$0xf]
    %v359 = vld [vmem:[#allocation5 + $0x2fc] sm:$0xf]
    %v360 = vld [vmem:[#allocation5 + $0x300] sm:$0xf]
    %v361 = vld [vmem:[#allocation5 + $0x304] sm:$0xf]
    %v362 = vld [vmem:[#allocation5 + $0x308] sm:$0xf]
    %v363 = vld [vmem:[#allocation5 + $0x30c] sm:$0xf]
    %v364 = vld [vmem:[#allocation5 + $0x310] sm:$0xf]
    %v365 = vld [vmem:[#allocation5 + $0x314] sm:$0xf]
    %v366 = vld [vmem:[#allocation5 + $0x318] sm:$0xf]
    %v367 = vld [vmem:[#allocation5 + $0x31c] sm:$0xf]
    %v368 = vld [vmem:[#allocation5 + $0x320] sm:$0xf]
    %v369 = vld [vmem:[#allocation5 + $0x324] sm:$0xf]
    %v370 = vld [vmem:[#allocation5 + $0x328] sm:$0xf]
    %v371 = vld [vmem:[#allocation5 + $0x32c] sm:$0xf]
    %v372 = vld [vmem:[#allocation5 + $0x330] sm:$0xf]
    %v373 = vld [vmem:[#allocation5 + $0x334] sm:$0xf]
    %v374 = vld [vmem:[#allocation5 + $0x338] sm:$0xf]
    %v375 = vld [vmem:[#allocation5 + $0x33c] sm:$0xf]
    %v376 = vld [vmem:[#allocation5 + $0x340] sm:$0xf]
    %v377 = vld [vmem:[#allocation5 + $0x344] sm:$0xf]
    %v378 = vld [vmem:[#allocation5 + $0x348] sm:$0xf]
    %v379 = vld [vmem:[#allocation5 + $0x34c] sm:$0xf]
    %v380 = vld [vmem:[#allocation5 + $0x350] sm:$0xf]
    %v381 = vld [vmem:[#allocation5 + $0x354] sm:$0xf]
    %v382 = vld [vmem:[#allocation5 + $0x358] sm:$0xf]
    %v383 = vld [vmem:[#allocation5 + $0x35c] sm:$0xf]
    %v384 = vld [vmem:[#allocation5 + $0x360] sm:$0xf]
    %v385 = vld [vmem:[#allocation5 + $0x364] sm:$0xf]
    %v386 = vld [vmem:[#allocation5 + $0x368] sm:$0xf]
    %v387 = vld [vmem:[#allocation5 + $0x36c] sm:$0xf]
    %v388 = vld [vmem:[#allocation5 + $0x370] sm:$0xf]
    %v389 = vld [vmem:[#allocation5 + $0x374] sm:$0xf]
    %v390 = vld [vmem:[#allocation5 + $0x378] sm:$0xf]
    %v391 = vld [vmem:[#allocation5 + $0x37c] sm:$0xf]
    %v392 = vld [vmem:[#allocation5 + $0x380] sm:$0xf]
    %v393 = vld [vmem:[#allocation5 + $0x384] sm:$0xf]
    %v394 = vld [vmem:[#allocation5 + $0x388] sm:$0xf]
    %v395 = vld [vmem:[#allocation5 + $0x38c] sm:$0xf]
    %v396 = vld [vmem:[#allocation5 + $0x390] sm:$0xf]
    %v397 = vld [vmem:[#allocation5 + $0x394] sm:$0xf]
    %v398 = vld [vmem:[#allocation5 + $0x398] sm:$0xf]
    %v399 = vld [vmem:[#allocation5 + $0x39c] sm:$0xf]
    %v400 = vld [vmem:[#allocation5 + $0x3a0] sm:$0xf]
    %v401 = vld [vmem:[#allocation5 + $0x3a4] sm:$0xf]
    %v402 = vld [vmem:[#allocation5 + $0x3a8] sm:$0xf]
    %v403 = vld [vmem:[#allocation5 + $0x3ac] sm:$0xf]
    %v404 = vld [vmem:[#allocation5 + $0x3b0] sm:$0xf]
    %v405 = vld [vmem:[#allocation5 + $0x3b4] sm:$0xf]
    %v406 = vld [vmem:[#allocation5 + $0x3b8] sm:$0xf]
    %v407 = vld [vmem:[#allocation5 + $0x3bc] sm:$0xf]
    %v408 = vld [vmem:[#allocation5 + $0x3c0] sm:$0xf]
    %v409 = vld [vmem:[#allocation5 + $0x3c4] sm:$0xf]
    %v410 = vld [vmem:[#allocation5 + $0x3c8] sm:$0xf]
    %v411 = vld [vmem:[#allocation5 + $0x3cc] sm:$0xf]
    %v412 = vld [vmem:[#allocation5 + $0x3d0] sm:$0xf]
    %v413 = vld [vmem:[#allocation5 + $0x3d4] sm:$0xf]
    %v414 = vld [vmem:[#allocation5 + $0x3d8] sm:$0xf]
    %v415 = vld [vmem:[#allocation5 + $0x3dc] sm:$0xf]
    %v416 = vld [vmem:[#allocation5 + $0x3e0] sm:$0xf]
    %v417 = vld [vmem:[#allocation5 + $0x3e4] sm:$0xf]
    %v418 = vld [vmem:[#allocation5 + $0x3e8] sm:$0xf]
    %v419 = vld [vmem:[#allocation5 + $0x3ec] sm:$0xf]
    %v420 = vld [vmem:[#allocation5 + $0x3f0] sm:$0xf]
    %v421 = vld [vmem:[#allocation5 + $0x3f4] sm:$0xf]
    %v422 = vld [vmem:[#allocation5 + $0x3f8] sm:$0xf]
    %v423 = vld [vmem:[#allocation5 + $0x3fc] sm:$0xf]
    %v424 = vld [vmem:[#allocation5 + $0x400] sm:$0xf]
    %v425 = vld [vmem:[#allocation5 + $0x404] sm:$0xf]
    %v426 = vld [vmem:[#allocation5 + $0x408] sm:$0xf]
    %v427 = vld [vmem:[#allocation5 + $0x40c] sm:$0xf]
    %v428 = vld [vmem:[#allocation5 + $0x410] sm:$0xf]
    %v429 = vld [vmem:[#allocation5 + $0x414] sm:$0xf]
    %v430 = vld [vmem:[#allocation5 + $0x418] sm:$0xf]
    %v431 = vld [vmem:[#allocation5 + $0x41c] sm:$0xf]
    %v432 = vld [vmem:[#allocation5 + $0x420] sm:$0xf]
    %v433 = vld [vmem:[#allocation5 + $0x424] sm:$0xf]
    %v434 = vld [vmem:[#allocation5 + $0x428] sm:$0xf]
    %v435 = vld [vmem:[#allocation5 + $0x42c] sm:$0xf]
    %v436 = vld [vmem:[#allocation5 + $0x430] sm:$0xf]
    %v437 = vld [vmem:[#allocation5 + $0x434] sm:$0xf]
    %v438 = vld [vmem:[#allocation5 + $0x438] sm:$0xf]
    %v439 = vld [vmem:[#allocation5 + $0x43c] sm:$0xf]
    %v440 = vld [vmem:[#allocation5 + $0x440] sm:$0xf]
    %v441 = vld [vmem:[#allocation5 + $0x444] sm:$0xf]
    %v442 = vld [vmem:[#allocation5 + $0x448] sm:$0xf]
    %v443 = vld [vmem:[#allocation5 + $0x44c] sm:$0xf]
    %v444 = vld [vmem:[#allocation5 + $0x450] sm:$0xf]
    %v445 = vld [vmem:[#allocation5 + $0x454] sm:$0xf]
    %v446 = vld [vmem:[#allocation5 + $0x458] sm:$0xf]
    %v447 = vld [vmem:[#allocation5 + $0x45c] sm:$0xf]
    %v448 = vld [vmem:[#allocation5 + $0x460] sm:$0xf]
    %v449 = vld [vmem:[#allocation5 + $0x464] sm:$0xf]
    %v450 = vld [vmem:[#allocation5 + $0x468] sm:$0xf]
    %v451 = vld [vmem:[#allocation5 + $0x46c] sm:$0xf]
    %v452 = vld [vmem:[#allocation5 + $0x470] sm:$0xf]
    %v453 = vld [vmem:[#allocation5 + $0x474] sm:$0xf]
    %v454 = vld [vmem:[#allocation5 + $0x478] sm:$0xf]
    %v455 = vld [vmem:[#allocation5 + $0x47c] sm:$0xf]
    %v456 = vld [vmem:[#allocation5 + $0x480] sm:$0xf]
    %v457 = vld [vmem:[#allocation5 + $0x484] sm:$0xf]
    %v458 = vld [vmem:[#allocation5 + $0x488] sm:$0xf]
    %v459 = vld [vmem:[#allocation5 + $0x48c] sm:$0xf]
    %v460 = vld [vmem:[#allocation5 + $0x490] sm:$0xf]
    %v461 = vld [vmem:[#allocation5 + $0x494] sm:$0xf]
    %v462 = vld [vmem:[#allocation5 + $0x498] sm:$0xf]
    %v463 = vld [vmem:[#allocation5 + $0x49c] sm:$0xf]
    %v464 = vld [vmem:[#allocation5 + $0x4a0] sm:$0xf]
    %v465 = vld [vmem:[#allocation5 + $0x4a4] sm:$0xf]
    %v466 = vld [vmem:[#allocation5 + $0x4a8] sm:$0xf]
    %v467 = vld [vmem:[#allocation5 + $0x4ac] sm:$0xf]
    %v468 = vld [vmem:[#allocation5 + $0x4b0] sm:$0xf]
    %v469 = vld [vmem:[#allocation5 + $0x4b4] sm:$0xf]
    %v470 = vld [vmem:[#allocation5 + $0x4b8] sm:$0xf]
    %v471 = vld [vmem:[#allocation5 + $0x4bc] sm:$0xf]
    %v472 = vld [vmem:[#allocation5 + $0x4c0] sm:$0xf]
    %v473 = vld [vmem:[#allocation5 + $0x4c4] sm:$0xf]
    %v474 = vld [vmem:[#allocation5 + $0x4c8] sm:$0xf]
    %v475 = vld [vmem:[#allocation5 + $0x4cc] sm:$0xf]
    %v476 = vld [vmem:[#allocation5 + $0x4d0] sm:$0xf]
    %v477 = vld [vmem:[#allocation5 + $0x4d4] sm:$0xf]
    %v478 = vld [vmem:[#allocation5 + $0x4d8] sm:$0xf]
    %v479 = vld [vmem:[#allocation5 + $0x4dc] sm:$0xf]
    %v480 = vld [vmem:[#allocation5 + $0x4e0] sm:$0xf]
    %v481 = vld [vmem:[#allocation5 + $0x4e4] sm:$0xf]
    %v482 = vld [vmem:[#allocation5 + $0x4e8] sm:$0xf]
    %v483 = vld [vmem:[#allocation5 + $0x4ec] sm:$0xf]
    %v484 = vld [vmem:[#allocation5 + $0x4f0] sm:$0xf]
    %v485 = vld [vmem:[#allocation5 + $0x4f4] sm:$0xf]
    %v486 = vld [vmem:[#allocation5 + $0x4f8] sm:$0xf]
    %v487 = vld [vmem:[#allocation5 + $0x4fc] sm:$0xf]
    %v488 = vld [vmem:[#allocation5 + $0x500] sm:$0xf]
    %v489 = vld [vmem:[#allocation5 + $0x504] sm:$0xf]
    %v490 = vld [vmem:[#allocation5 + $0x508] sm:$0xf]
    %v491 = vld [vmem:[#allocation5 + $0x50c] sm:$0xf]
    %v492 = vld [vmem:[#allocation5 + $0x510] sm:$0xf]
    %v493 = vld [vmem:[#allocation5 + $0x514] sm:$0xf]
    %v494 = vld [vmem:[#allocation5 + $0x518] sm:$0xf]
    %v495 = vld [vmem:[#allocation5 + $0x51c] sm:$0xf]
    %v496 = vld [vmem:[#allocation5 + $0x520] sm:$0xf]
    %v497 = vld [vmem:[#allocation5 + $0x524] sm:$0xf]
    %v498 = vld [vmem:[#allocation5 + $0x528] sm:$0xf]
    %v499 = vld [vmem:[#allocation5 + $0x52c] sm:$0xf]
    %v500 = vld [vmem:[#allocation5 + $0x530] sm:$0xf]
    %v501 = vld [vmem:[#allocation5 + $0x534] sm:$0xf]
    %v502 = vld [vmem:[#allocation5 + $0x538] sm:$0xf]
    %v503 = vld [vmem:[#allocation5 + $0x53c] sm:$0xf]
    %v504 = vld [vmem:[#allocation5 + $0x540] sm:$0xf]
    %v505 = vld [vmem:[#allocation5 + $0x544] sm:$0xf]
    %v506 = vld [vmem:[#allocation5 + $0x548] sm:$0xf]
    %v507 = vld [vmem:[#allocation5 + $0x54c] sm:$0xf]
    %v508 = vld [vmem:[#allocation5 + $0x550] sm:$0xf]
    %v509 = vld [vmem:[#allocation5 + $0x554] sm:$0xf]
    %v510 = vld [vmem:[#allocation5 + $0x558] sm:$0xf]
    %v511 = vld [vmem:[#allocation5 + $0x55c] sm:$0xf]
    %v512 = vld [vmem:[#allocation5 + $0x560] sm:$0xf]
    %v513 = vld [vmem:[#allocation5 + $0x564] sm:$0xf]
    %v514 = vld [vmem:[#allocation5 + $0x568] sm:$0xf]
    %v515 = vld [vmem:[#allocation5 + $0x56c] sm:$0xf]
    %v516 = vld [vmem:[#allocation5 + $0x570] sm:$0xf]
    %v517 = vld [vmem:[#allocation5 + $0x574] sm:$0xf]
    %v518 = vld [vmem:[#allocation5 + $0x578] sm:$0xf]
    %v519 = vld [vmem:[#allocation5 + $0x57c] sm:$0xf]
    %v520 = vld [vmem:[#allocation5 + $0x580] sm:$0xf]
    %v521 = vld [vmem:[#allocation5 + $0x584] sm:$0xf]
    %v522 = vld [vmem:[#allocation5 + $0x588] sm:$0xf]
    %v523 = vld [vmem:[#allocation5 + $0x58c] sm:$0xf]
    %v524 = vld [vmem:[#allocation5 + $0x590] sm:$0xf]
    %v525 = vld [vmem:[#allocation5 + $0x594] sm:$0xf]
    %v526 = vld [vmem:[#allocation5 + $0x598] sm:$0xf]
    %v527 = vld [vmem:[#allocation5 + $0x59c] sm:$0xf]
    %v528 = vld [vmem:[#allocation5 + $0x5a0] sm:$0xf]
    %v529 = vld [vmem:[#allocation5 + $0x5a4] sm:$0xf]
    %v530 = vld [vmem:[#allocation5 + $0x5a8] sm:$0xf]
    %v531 = vld [vmem:[#allocation5 + $0x5ac] sm:$0xf]
    %v532 = vld [vmem:[#allocation5 + $0x5b0] sm:$0xf]
    %v533 = vld [vmem:[#allocation5 + $0x5b4] sm:$0xf]
    %v534 = vld [vmem:[#allocation5 + $0x5b8] sm:$0xf]
    %v535 = vld [vmem:[#allocation5 + $0x5bc] sm:$0xf]
    %v536 = vld [vmem:[#allocation5 + $0x5c0] sm:$0xf]
    %v537 = vld [vmem:[#allocation5 + $0x5c4] sm:$0xf]
    %v538 = vld [vmem:[#allocation5 + $0x5c8] sm:$0xf]
    %v539 = vld [vmem:[#allocation5 + $0x5cc] sm:$0xf]
    %v540 = vld [vmem:[#allocation5 + $0x5d0] sm:$0xf]
    %v541 = vld [vmem:[#allocation5 + $0x5d4] sm:$0xf]
    %v542 = vld [vmem:[#allocation5 + $0x5d8] sm:$0xf]
    %v543 = vld [vmem:[#allocation5 + $0x5dc] sm:$0xf]
    %v544 = vld [vmem:[#allocation5 + $0x5e0] sm:$0xf]
    %v545 = vld [vmem:[#allocation5 + $0x5e4] sm:$0xf]
    %v546 = vld [vmem:[#allocation5 + $0x5e8] sm:$0xf]
    %v547 = vld [vmem:[#allocation5 + $0x5ec] sm:$0xf]
    %v548 = vld [vmem:[#allocation5 + $0x5f0] sm:$0xf]
    %v549 = vld [vmem:[#allocation5 + $0x5f4] sm:$0xf]
    %v550 = vld [vmem:[#allocation5 + $0x5f8] sm:$0xf]
    %v551 = vld [vmem:[#allocation5 + $0x5fc] sm:$0xf]
    %v552 = vld [vmem:[%s2] sm:$0x1]
    %v554 = vperm.slane %v552, 0
    %v940 = vunpack.c.l.b16 %v168
    %v941 = vunpack.c.l.b16 %v169
    %v942 = vunpack.c.l.b16 %v170
    %v943 = vunpack.c.l.b16 %v171
    %v944 = vunpack.c.l.b16 %v172
    %v945 = vunpack.c.l.b16 %v173
    %v946 = vunpack.c.l.b16 %v174
    %v947 = vunpack.c.l.b16 %v175
    %v948 = vunpack.c.l.b16 %v176
    %v949 = vunpack.c.l.b16 %v177
    %v950 = vunpack.c.l.b16 %v178
    %v951 = vunpack.c.l.b16 %v179
    %v952 = vunpack.c.l.b16 %v180
    %v953 = vunpack.c.l.b16 %v181
    %v954 = vunpack.c.l.b16 %v182
    %v955 = vunpack.c.l.b16 %v183
    %v956 = vunpack.c.l.b16 %v184
    %v957 = vunpack.c.l.b16 %v185
    %v958 = vunpack.c.l.b16 %v186
    %v959 = vunpack.c.l.b16 %v187
    %v960 = vunpack.c.l.b16 %v188
    %v961 = vunpack.c.l.b16 %v189
    %v962 = vunpack.c.l.b16 %v190
    %v963 = vunpack.c.l.b16 %v191
    %v964 = vunpack.c.l.b16 %v192
    %v965 = vunpack.c.l.b16 %v193
    %v966 = vunpack.c.l.b16 %v194
    %v967 = vunpack.c.l.b16 %v195
    %v968 = vunpack.c.l.b16 %v196
    %v969 = vunpack.c.l.b16 %v197
    %v970 = vunpack.c.l.b16 %v198
    %v971 = vunpack.c.l.b16 %v199
    %v972 = vunpack.c.l.b16 %v200
    %v973 = vunpack.c.l.b16 %v201
    %v974 = vunpack.c.l.b16 %v202
    %v975 = vunpack.c.l.b16 %v203
    %v976 = vunpack.c.l.b16 %v204
    %v977 = vunpack.c.l.b16 %v205
    %v978 = vunpack.c.l.b16 %v206
    %v979 = vunpack.c.l.b16 %v207
    %v980 = vunpack.c.l.b16 %v208
    %v981 = vunpack.c.l.b16 %v209
    %v982 = vunpack.c.l.b16 %v210
    %v983 = vunpack.c.l.b16 %v211
    %v984 = vunpack.c.l.b16 %v212
    %v985 = vunpack.c.l.b16 %v213
    %v986 = vunpack.c.l.b16 %v214
    %v987 = vunpack.c.l.b16 %v215
    %v988 = vunpack.c.l.b16 %v216
    %v989 = vunpack.c.l.b16 %v217
    %v990 = vunpack.c.l.b16 %v218
    %v991 = vunpack.c.l.b16 %v219
    %v992 = vunpack.c.l.b16 %v220
    %v993 = vunpack.c.l.b16 %v221
    %v994 = vunpack.c.l.b16 %v222
    %v995 = vunpack.c.l.b16 %v223
    %v996 = vunpack.c.l.b16 %v224
    %v997 = vunpack.c.l.b16 %v225
    %v998 = vunpack.c.l.b16 %v226
    %v999 = vunpack.c.l.b16 %v227
    %v1000 = vunpack.c.l.b16 %v228
    %v1001 = vunpack.c.l.b16 %v229
    %v1002 = vunpack.c.l.b16 %v230
    %v1003 = vunpack.c.l.b16 %v231
    %v1004 = vunpack.c.l.b16 %v232
    %v1005 = vunpack.c.l.b16 %v233
    %v1006 = vunpack.c.l.b16 %v234
    %v1007 = vunpack.c.l.b16 %v235
    %v1008 = vunpack.c.l.b16 %v236
    %v1009 = vunpack.c.l.b16 %v237
    %v1010 = vunpack.c.l.b16 %v238
    %v1011 = vunpack.c.l.b16 %v239
    %v1012 = vunpack.c.l.b16 %v240
    %v1013 = vunpack.c.l.b16 %v241
    %v1014 = vunpack.c.l.b16 %v242
    %v1015 = vunpack.c.l.b16 %v243
    %v1016 = vunpack.c.l.b16 %v244
    %v1017 = vunpack.c.l.b16 %v245
    %v1018 = vunpack.c.l.b16 %v246
    %v1019 = vunpack.c.l.b16 %v247
    %v1020 = vunpack.c.l.b16 %v248
    %v1021 = vunpack.c.l.b16 %v249
    %v1022 = vunpack.c.l.b16 %v250
    %v1023 = vunpack.c.l.b16 %v251
    %v1024 = vunpack.c.l.b16 %v252
    %v1025 = vunpack.c.l.b16 %v253
    %v1026 = vunpack.c.l.b16 %v254
    %v1027 = vunpack.c.l.b16 %v255
    %v1028 = vunpack.c.l.b16 %v256
    %v1029 = vunpack.c.l.b16 %v257
    %v1030 = vunpack.c.l.b16 %v258
    %v1031 = vunpack.c.l.b16 %v259
    %v1032 = vunpack.c.l.b16 %v260
    %v1033 = vunpack.c.l.b16 %v261
    %v1034 = vunpack.c.l.b16 %v262
    %v1035 = vunpack.c.l.b16 %v263
    %v1036 = vunpack.c.l.b16 %v264
    %v1037 = vunpack.c.l.b16 %v265
    %v1038 = vunpack.c.l.b16 %v266
    %v1039 = vunpack.c.l.b16 %v267
    %v1040 = vunpack.c.l.b16 %v268
    %v1041 = vunpack.c.l.b16 %v269
    %v1042 = vunpack.c.l.b16 %v270
    %v1043 = vunpack.c.l.b16 %v271
    %v1044 = vunpack.c.l.b16 %v272
    %v1045 = vunpack.c.l.b16 %v273
    %v1046 = vunpack.c.l.b16 %v274
    %v1047 = vunpack.c.l.b16 %v275
    %v1048 = vunpack.c.l.b16 %v276
    %v1049 = vunpack.c.l.b16 %v277
    %v1050 = vunpack.c.l.b16 %v278
    %v1051 = vunpack.c.l.b16 %v279
    %v1052 = vunpack.c.l.b16 %v280
    %v1053 = vunpack.c.l.b16 %v281
    %v1054 = vunpack.c.l.b16 %v282
    %v1055 = vunpack.c.l.b16 %v283
    %v1056 = vunpack.c.l.b16 %v284
    %v1057 = vunpack.c.l.b16 %v285
    %v1058 = vunpack.c.l.b16 %v286
    %v1059 = vunpack.c.l.b16 %v287
    %v1060 = vunpack.c.l.b16 %v288
    %v1061 = vunpack.c.l.b16 %v289
    %v1062 = vunpack.c.l.b16 %v290
    %v1063 = vunpack.c.l.b16 %v291
    %v1064 = vunpack.c.l.b16 %v292
    %v1065 = vunpack.c.l.b16 %v293
    %v1066 = vunpack.c.l.b16 %v294
    %v1067 = vunpack.c.l.b16 %v295
    %v1068 = vunpack.c.l.b16 %v296
    %v1069 = vunpack.c.l.b16 %v297
    %v1070 = vunpack.c.l.b16 %v298
    %v1071 = vunpack.c.l.b16 %v299
    %v1072 = vunpack.c.l.b16 %v300
    %v1073 = vunpack.c.l.b16 %v301
    %v1074 = vunpack.c.l.b16 %v302
    %v1075 = vunpack.c.l.b16 %v303
    %v1076 = vunpack.c.l.b16 %v304
    %v1077 = vunpack.c.l.b16 %v305
    %v1078 = vunpack.c.l.b16 %v306
    %v1079 = vunpack.c.l.b16 %v307
    %v1080 = vunpack.c.l.b16 %v308
    %v1081 = vunpack.c.l.b16 %v309
    %v1082 = vunpack.c.l.b16 %v310
    %v1083 = vunpack.c.l.b16 %v311
    %v1084 = vunpack.c.l.b16 %v312
    %v1085 = vunpack.c.l.b16 %v313
    %v1086 = vunpack.c.l.b16 %v314
    %v1087 = vunpack.c.l.b16 %v315
    %v1088 = vunpack.c.l.b16 %v316
    %v1089 = vunpack.c.l.b16 %v317
    %v1090 = vunpack.c.l.b16 %v318
    %v1091 = vunpack.c.l.b16 %v319
    %v1092 = vunpack.c.l.b16 %v320
    %v1093 = vunpack.c.l.b16 %v321
    %v1094 = vunpack.c.l.b16 %v322
    %v1095 = vunpack.c.l.b16 %v323
    %v1096 = vunpack.c.l.b16 %v324
    %v1097 = vunpack.c.l.b16 %v325
    %v1098 = vunpack.c.l.b16 %v326
    %v1099 = vunpack.c.l.b16 %v327
    %v1100 = vunpack.c.l.b16 %v328
    %v1101 = vunpack.c.l.b16 %v329
    %v1102 = vunpack.c.l.b16 %v330
    %v1103 = vunpack.c.l.b16 %v331
    %v1104 = vunpack.c.l.b16 %v332
    %v1105 = vunpack.c.l.b16 %v333
    %v1106 = vunpack.c.l.b16 %v334
    %v1107 = vunpack.c.l.b16 %v335
    %v1108 = vunpack.c.l.b16 %v336
    %v1109 = vunpack.c.l.b16 %v337
    %v1110 = vunpack.c.l.b16 %v338
    %v1111 = vunpack.c.l.b16 %v339
    %v1112 = vunpack.c.l.b16 %v340
    %v1113 = vunpack.c.l.b16 %v341
    %v1114 = vunpack.c.l.b16 %v342
    %v1115 = vunpack.c.l.b16 %v343
    %v1116 = vunpack.c.l.b16 %v344
    %v1117 = vunpack.c.l.b16 %v345
    %v1118 = vunpack.c.l.b16 %v346
    %v1119 = vunpack.c.l.b16 %v347
    %v1120 = vunpack.c.l.b16 %v348
    %v1121 = vunpack.c.l.b16 %v349
    %v1122 = vunpack.c.l.b16 %v350
    %v1123 = vunpack.c.l.b16 %v351
    %v1124 = vunpack.c.l.b16 %v352
    %v1125 = vunpack.c.l.b16 %v353
    %v1126 = vunpack.c.l.b16 %v354
    %v1127 = vunpack.c.l.b16 %v355
    %v1128 = vunpack.c.l.b16 %v356
    %v1129 = vunpack.c.l.b16 %v357
    %v1130 = vunpack.c.l.b16 %v358
    %v1131 = vunpack.c.l.b16 %v359
    %v1132 = vunpack.c.l.b16 %v360
    %v1133 = vunpack.c.l.b16 %v361
    %v1134 = vunpack.c.l.b16 %v362
    %v1135 = vunpack.c.l.b16 %v363
    %v1136 = vunpack.c.l.b16 %v364
    %v1137 = vunpack.c.l.b16 %v365
    %v1138 = vunpack.c.l.b16 %v366
    %v1139 = vunpack.c.l.b16 %v367
    %v1140 = vunpack.c.l.b16 %v368
    %v1141 = vunpack.c.l.b16 %v369
    %v1142 = vunpack.c.l.b16 %v370
    %v1143 = vunpack.c.l.b16 %v371
    %v1144 = vunpack.c.l.b16 %v372
    %v1145 = vunpack.c.l.b16 %v373
    %v1146 = vunpack.c.l.b16 %v374
    %v1147 = vunpack.c.l.b16 %v375
    %v1148 = vunpack.c.l.b16 %v376
    %v1149 = vunpack.c.l.b16 %v377
    %v1150 = vunpack.c.l.b16 %v378
    %v1151 = vunpack.c.l.b16 %v379
    %v1152 = vunpack.c.l.b16 %v380
    %v1153 = vunpack.c.l.b16 %v381
    %v1154 = vunpack.c.l.b16 %v382
    %v1155 = vunpack.c.l.b16 %v383
    %v1156 = vunpack.c.l.b16 %v384
    %v1157 = vunpack.c.l.b16 %v385
    %v1158 = vunpack.c.l.b16 %v386
    %v1159 = vunpack.c.l.b16 %v387
    %v1160 = vunpack.c.l.b16 %v388
    %v1161 = vunpack.c.l.b16 %v389
    %v1162 = vunpack.c.l.b16 %v390
    %v1163 = vunpack.c.l.b16 %v391
    %v1164 = vunpack.c.l.b16 %v392
    %v1165 = vunpack.c.l.b16 %v393
    %v1166 = vunpack.c.l.b16 %v394
    %v1167 = vunpack.c.l.b16 %v395
    %v1168 = vunpack.c.l.b16 %v396
    %v1169 = vunpack.c.l.b16 %v397
    %v1170 = vunpack.c.l.b16 %v398
    %v1171 = vunpack.c.l.b16 %v399
    %v1172 = vunpack.c.l.b16 %v400
    %v1173 = vunpack.c.l.b16 %v401
    %v1174 = vunpack.c.l.b16 %v402
    %v1175 = vunpack.c.l.b16 %v403
    %v1176 = vunpack.c.l.b16 %v404
    %v1177 = vunpack.c.l.b16 %v405
    %v1178 = vunpack.c.l.b16 %v406
    %v1179 = vunpack.c.l.b16 %v407
    %v1180 = vunpack.c.l.b16 %v408
    %v1181 = vunpack.c.l.b16 %v409
    %v1182 = vunpack.c.l.b16 %v410
    %v1183 = vunpack.c.l.b16 %v411
    %v1184 = vunpack.c.l.b16 %v412
    %v1185 = vunpack.c.l.b16 %v413
    %v1186 = vunpack.c.l.b16 %v414
    %v1187 = vunpack.c.l.b16 %v415
    %v1188 = vunpack.c.l.b16 %v416
    %v1189 = vunpack.c.l.b16 %v417
    %v1190 = vunpack.c.l.b16 %v418
    %v1191 = vunpack.c.l.b16 %v419
    %v1192 = vunpack.c.l.b16 %v420
    %v1193 = vunpack.c.l.b16 %v421
    %v1194 = vunpack.c.l.b16 %v422
    %v1195 = vunpack.c.l.b16 %v423
    %v1196 = vunpack.c.l.b16 %v424
    %v1197 = vunpack.c.l.b16 %v425
    %v1198 = vunpack.c.l.b16 %v426
    %v1199 = vunpack.c.l.b16 %v427
    %v1200 = vunpack.c.l.b16 %v428
    %v1201 = vunpack.c.l.b16 %v429
    %v1202 = vunpack.c.l.b16 %v430
    %v1203 = vunpack.c.l.b16 %v431
    %v1204 = vunpack.c.l.b16 %v432
    %v1205 = vunpack.c.l.b16 %v433
    %v1206 = vunpack.c.l.b16 %v434
    %v1207 = vunpack.c.l.b16 %v435
    %v1208 = vunpack.c.l.b16 %v436
    %v1209 = vunpack.c.l.b16 %v437
    %v1210 = vunpack.c.l.b16 %v438
    %v1211 = vunpack.c.l.b16 %v439
    %v1212 = vunpack.c.l.b16 %v440
    %v1213 = vunpack.c.l.b16 %v441
    %v1214 = vunpack.c.l.b16 %v442
    %v1215 = vunpack.c.l.b16 %v443
    %v1216 = vunpack.c.l.b16 %v444
    %v1217 = vunpack.c.l.b16 %v445
    %v1218 = vunpack.c.l.b16 %v446
    %v1219 = vunpack.c.l.b16 %v447
    %v1220 = vunpack.c.l.b16 %v448
    %v1221 = vunpack.c.l.b16 %v449
    %v1222 = vunpack.c.l.b16 %v450
    %v1223 = vunpack.c.l.b16 %v451
    %v1224 = vunpack.c.l.b16 %v452
    %v1225 = vunpack.c.l.b16 %v453
    %v1226 = vunpack.c.l.b16 %v454
    %v1227 = vunpack.c.l.b16 %v455
    %v1228 = vunpack.c.l.b16 %v456
    %v1229 = vunpack.c.l.b16 %v457
    %v1230 = vunpack.c.l.b16 %v458
    %v1231 = vunpack.c.l.b16 %v459
    %v1232 = vunpack.c.l.b16 %v460
    %v1233 = vunpack.c.l.b16 %v461
    %v1234 = vunpack.c.l.b16 %v462
    %v1235 = vunpack.c.l.b16 %v463
    %v1236 = vunpack.c.l.b16 %v464
    %v1237 = vunpack.c.l.b16 %v465
    %v1238 = vunpack.c.l.b16 %v466
    %v1239 = vunpack.c.l.b16 %v467
    %v1240 = vunpack.c.l.b16 %v468
    %v1241 = vunpack.c.l.b16 %v469
    %v1242 = vunpack.c.l.b16 %v470
    %v1243 = vunpack.c.l.b16 %v471
    %v1244 = vunpack.c.l.b16 %v472
    %v1245 = vunpack.c.l.b16 %v473
    %v1246 = vunpack.c.l.b16 %v474
    %v1247 = vunpack.c.l.b16 %v475
    %v1248 = vunpack.c.l.b16 %v476
    %v1249 = vunpack.c.l.b16 %v477
    %v1250 = vunpack.c.l.b16 %v478
    %v1251 = vunpack.c.l.b16 %v479
    %v1252 = vunpack.c.l.b16 %v480
    %v1253 = vunpack.c.l.b16 %v481
    %v1254 = vunpack.c.l.b16 %v482
    %v1255 = vunpack.c.l.b16 %v483
    %v1256 = vunpack.c.l.b16 %v484
    %v1257 = vunpack.c.l.b16 %v485
    %v1258 = vunpack.c.l.b16 %v486
    %v1259 = vunpack.c.l.b16 %v487
    %v1260 = vunpack.c.l.b16 %v488
    %v1261 = vunpack.c.l.b16 %v489
    %v1262 = vunpack.c.l.b16 %v490
    %v1263 = vunpack.c.l.b16 %v491
    %v1264 = vunpack.c.l.b16 %v492
    %v1265 = vunpack.c.l.b16 %v493
    %v1266 = vunpack.c.l.b16 %v494
    %v1267 = vunpack.c.l.b16 %v495
    %v1268 = vunpack.c.l.b16 %v496
    %v1269 = vunpack.c.l.b16 %v497
    %v1270 = vunpack.c.l.b16 %v498
    %v1271 = vunpack.c.l.b16 %v499
    %v1272 = vunpack.c.l.b16 %v500
    %v1273 = vunpack.c.l.b16 %v501
    %v1274 = vunpack.c.l.b16 %v502
    %v1275 = vunpack.c.l.b16 %v503
    %v1276 = vunpack.c.l.b16 %v504
    %v1277 = vunpack.c.l.b16 %v505
    %v1278 = vunpack.c.l.b16 %v506
    %v1279 = vunpack.c.l.b16 %v507
    %v1280 = vunpack.c.l.b16 %v508
    %v1281 = vunpack.c.l.b16 %v509
    %v1282 = vunpack.c.l.b16 %v510
    %v1283 = vunpack.c.l.b16 %v511
    %v1284 = vunpack.c.l.b16 %v512
    %v1285 = vunpack.c.l.b16 %v513
    %v1286 = vunpack.c.l.b16 %v514
    %v1287 = vunpack.c.l.b16 %v515
    %v1288 = vunpack.c.l.b16 %v516
    %v1289 = vunpack.c.l.b16 %v517
    %v1290 = vunpack.c.l.b16 %v518
    %v1291 = vunpack.c.l.b16 %v519
    %v1292 = vunpack.c.l.b16 %v520
    %v1293 = vunpack.c.l.b16 %v521
    %v1294 = vunpack.c.l.b16 %v522
    %v1295 = vunpack.c.l.b16 %v523
    %v1296 = vunpack.c.l.b16 %v524
    %v1297 = vunpack.c.l.b16 %v525
    %v1298 = vunpack.c.l.b16 %v526
    %v1299 = vunpack.c.l.b16 %v527
    %v1300 = vunpack.c.l.b16 %v528
    %v1301 = vunpack.c.l.b16 %v529
    %v1302 = vunpack.c.l.b16 %v530
    %v1303 = vunpack.c.l.b16 %v531
    %v1304 = vunpack.c.l.b16 %v532
    %v1305 = vunpack.c.l.b16 %v533
    %v1306 = vunpack.c.l.b16 %v534
    %v1307 = vunpack.c.l.b16 %v535
    %v1308 = vunpack.c.l.b16 %v536
    %v1309 = vunpack.c.l.b16 %v537
    %v1310 = vunpack.c.l.b16 %v538
    %v1311 = vunpack.c.l.b16 %v539
    %v1312 = vunpack.c.l.b16 %v540
    %v1313 = vunpack.c.l.b16 %v541
    %v1314 = vunpack.c.l.b16 %v542
    %v1315 = vunpack.c.l.b16 %v543
    %v1316 = vunpack.c.l.b16 %v544
    %v1317 = vunpack.c.l.b16 %v545
    %v1318 = vunpack.c.l.b16 %v546
    %v1319 = vunpack.c.l.b16 %v547
    %v1320 = vunpack.c.l.b16 %v548
    %v1321 = vunpack.c.l.b16 %v549
    %v1322 = vunpack.c.l.b16 %v550
    %v1323 = vunpack.c.l.b16 %v551
    %v1324 = vpack.c.b16 %v941, %v940
    %v1325 = vpack.c.b16 %v943, %v942
    %v1326 = vpack.c.b16 %v945, %v944
    %v1327 = vpack.c.b16 %v947, %v946
    %v1328 = vpack.c.b16 %v949, %v948
    %v1329 = vpack.c.b16 %v951, %v950
    %v1330 = vpack.c.b16 %v953, %v952
    %v1331 = vpack.c.b16 %v955, %v954
    %v1332 = vpack.c.b16 %v957, %v956
    %v1333 = vpack.c.b16 %v959, %v958
    %v1334 = vpack.c.b16 %v961, %v960
    %v1335 = vpack.c.b16 %v963, %v962
    %v1336 = vpack.c.b16 %v965, %v964
    %v1337 = vpack.c.b16 %v967, %v966
    %v1338 = vpack.c.b16 %v969, %v968
    %v1339 = vpack.c.b16 %v971, %v970
    %v1340 = vpack.c.b16 %v973, %v972
    %v1341 = vpack.c.b16 %v975, %v974
    %v1342 = vpack.c.b16 %v977, %v976
    %v1343 = vpack.c.b16 %v979, %v978
    %v1344 = vpack.c.b16 %v981, %v980
    %v1345 = vpack.c.b16 %v983, %v982
    %v1346 = vpack.c.b16 %v985, %v984
    %v1347 = vpack.c.b16 %v987, %v986
    %v1348 = vpack.c.b16 %v989, %v988
    %v1349 = vpack.c.b16 %v991, %v990
    %v1350 = vpack.c.b16 %v993, %v992
    %v1351 = vpack.c.b16 %v995, %v994
    %v1352 = vpack.c.b16 %v997, %v996
    %v1353 = vpack.c.b16 %v999, %v998
    %v1354 = vpack.c.b16 %v1001, %v1000
    %v1355 = vpack.c.b16 %v1003, %v1002
    %v1356 = vpack.c.b16 %v1005, %v1004
    %v1357 = vpack.c.b16 %v1007, %v1006
    %v1358 = vpack.c.b16 %v1009, %v1008
    %v1359 = vpack.c.b16 %v1011, %v1010
    %v1360 = vpack.c.b16 %v1013, %v1012
    %v1361 = vpack.c.b16 %v1015, %v1014
    %v1362 = vpack.c.b16 %v1017, %v1016
    %v1363 = vpack.c.b16 %v1019, %v1018
    %v1364 = vpack.c.b16 %v1021, %v1020
    %v1365 = vpack.c.b16 %v1023, %v1022
    %v1366 = vpack.c.b16 %v1025, %v1024
    %v1367 = vpack.c.b16 %v1027, %v1026
    %v1368 = vpack.c.b16 %v1029, %v1028
    %v1369 = vpack.c.b16 %v1031, %v1030
    %v1370 = vpack.c.b16 %v1033, %v1032
    %v1371 = vpack.c.b16 %v1035, %v1034
    %v1372 = vpack.c.b16 %v1037, %v1036
    %v1373 = vpack.c.b16 %v1039, %v1038
    %v1374 = vpack.c.b16 %v1041, %v1040
    %v1375 = vpack.c.b16 %v1043, %v1042
    %v1376 = vpack.c.b16 %v1045, %v1044
    %v1377 = vpack.c.b16 %v1047, %v1046
    %v1378 = vpack.c.b16 %v1049, %v1048
    %v1379 = vpack.c.b16 %v1051, %v1050
    %v1380 = vpack.c.b16 %v1053, %v1052
    %v1381 = vpack.c.b16 %v1055, %v1054
    %v1382 = vpack.c.b16 %v1057, %v1056
    %v1383 = vpack.c.b16 %v1059, %v1058
    %v1384 = vpack.c.b16 %v1061, %v1060
    %v1385 = vpack.c.b16 %v1063, %v1062
    %v1386 = vpack.c.b16 %v1065, %v1064
    %v1387 = vpack.c.b16 %v1067, %v1066
    %v1388 = vpack.c.b16 %v1069, %v1068
    %v1389 = vpack.c.b16 %v1071, %v1070
    %v1390 = vpack.c.b16 %v1073, %v1072
    %v1391 = vpack.c.b16 %v1075, %v1074
    %v1392 = vpack.c.b16 %v1077, %v1076
    %v1393 = vpack.c.b16 %v1079, %v1078
    %v1394 = vpack.c.b16 %v1081, %v1080
    %v1395 = vpack.c.b16 %v1083, %v1082
    %v1396 = vpack.c.b16 %v1085, %v1084
    %v1397 = vpack.c.b16 %v1087, %v1086
    %v1398 = vpack.c.b16 %v1089, %v1088
    %v1399 = vpack.c.b16 %v1091, %v1090
    %v1400 = vpack.c.b16 %v1093, %v1092
    %v1401 = vpack.c.b16 %v1095, %v1094
    %v1402 = vpack.c.b16 %v1097, %v1096
    %v1403 = vpack.c.b16 %v1099, %v1098
    %v1404 = vpack.c.b16 %v1101, %v1100
    %v1405 = vpack.c.b16 %v1103, %v1102
    %v1406 = vpack.c.b16 %v1105, %v1104
    %v1407 = vpack.c.b16 %v1107, %v1106
    %v1408 = vpack.c.b16 %v1109, %v1108
    %v1409 = vpack.c.b16 %v1111, %v1110
    %v1410 = vpack.c.b16 %v1113, %v1112
    %v1411 = vpack.c.b16 %v1115, %v1114
    %v1412 = vpack.c.b16 %v1117, %v1116
    %v1413 = vpack.c.b16 %v1119, %v1118
    %v1414 = vpack.c.b16 %v1121, %v1120
    %v1415 = vpack.c.b16 %v1123, %v1122
    %v1416 = vpack.c.b16 %v1125, %v1124
    %v1417 = vpack.c.b16 %v1127, %v1126
    %v1418 = vpack.c.b16 %v1129, %v1128
    %v1419 = vpack.c.b16 %v1131, %v1130
    %v1420 = vpack.c.b16 %v1133, %v1132
    %v1421 = vpack.c.b16 %v1135, %v1134
    %v1422 = vpack.c.b16 %v1137, %v1136
    %v1423 = vpack.c.b16 %v1139, %v1138
    %v1424 = vpack.c.b16 %v1141, %v1140
    %v1425 = vpack.c.b16 %v1143, %v1142
    %v1426 = vpack.c.b16 %v1145, %v1144
    %v1427 = vpack.c.b16 %v1147, %v1146
    %v1428 = vpack.c.b16 %v1149, %v1148
    %v1429 = vpack.c.b16 %v1151, %v1150
    %v1430 = vpack.c.b16 %v1153, %v1152
    %v1431 = vpack.c.b16 %v1155, %v1154
    %v1432 = vpack.c.b16 %v1157, %v1156
    %v1433 = vpack.c.b16 %v1159, %v1158
    %v1434 = vpack.c.b16 %v1161, %v1160
    %v1435 = vpack.c.b16 %v1163, %v1162
    %v1436 = vpack.c.b16 %v1165, %v1164
    %v1437 = vpack.c.b16 %v1167, %v1166
    %v1438 = vpack.c.b16 %v1169, %v1168
    %v1439 = vpack.c.b16 %v1171, %v1170
    %v1440 = vpack.c.b16 %v1173, %v1172
    %v1441 = vpack.c.b16 %v1175, %v1174
    %v1442 = vpack.c.b16 %v1177, %v1176
    %v1443 = vpack.c.b16 %v1179, %v1178
    %v1444 = vpack.c.b16 %v1181, %v1180
    %v1445 = vpack.c.b16 %v1183, %v1182
    %v1446 = vpack.c.b16 %v1185, %v1184
    %v1447 = vpack.c.b16 %v1187, %v1186
    %v1448 = vpack.c.b16 %v1189, %v1188
    %v1449 = vpack.c.b16 %v1191, %v1190
    %v1450 = vpack.c.b16 %v1193, %v1192
    %v1451 = vpack.c.b16 %v1195, %v1194
    %v1452 = vpack.c.b16 %v1197, %v1196
    %v1453 = vpack.c.b16 %v1199, %v1198
    %v1454 = vpack.c.b16 %v1201, %v1200
    %v1455 = vpack.c.b16 %v1203, %v1202
    %v1456 = vpack.c.b16 %v1205, %v1204
    %v1457 = vpack.c.b16 %v1207, %v1206
    %v1458 = vpack.c.b16 %v1209, %v1208
    %v1459 = vpack.c.b16 %v1211, %v1210
    %v1460 = vpack.c.b16 %v1213, %v1212
    %v1461 = vpack.c.b16 %v1215, %v1214
    %v1462 = vpack.c.b16 %v1217, %v1216
    %v1463 = vpack.c.b16 %v1219, %v1218
    %v1464 = vpack.c.b16 %v1221, %v1220
    %v1465 = vpack.c.b16 %v1223, %v1222
    %v1466 = vpack.c.b16 %v1225, %v1224
    %v1467 = vpack.c.b16 %v1227, %v1226
    %v1468 = vpack.c.b16 %v1229, %v1228
    %v1469 = vpack.c.b16 %v1231, %v1230
    %v1470 = vpack.c.b16 %v1233, %v1232
    %v1471 = vpack.c.b16 %v1235, %v1234
    %v1472 = vpack.c.b16 %v1237, %v1236
    %v1473 = vpack.c.b16 %v1239, %v1238
    %v1474 = vpack.c.b16 %v1241, %v1240
    %v1475 = vpack.c.b16 %v1243, %v1242
    %v1476 = vpack.c.b16 %v1245, %v1244
    %v1477 = vpack.c.b16 %v1247, %v1246
    %v1478 = vpack.c.b16 %v1249, %v1248
    %v1479 = vpack.c.b16 %v1251, %v1250
    %v1480 = vpack.c.b16 %v1253, %v1252
    %v1481 = vpack.c.b16 %v1255, %v1254
    %v1482 = vpack.c.b16 %v1257, %v1256
    %v1483 = vpack.c.b16 %v1259, %v1258
    %v1484 = vpack.c.b16 %v1261, %v1260
    %v1485 = vpack.c.b16 %v1263, %v1262
    %v1486 = vpack.c.b16 %v1265, %v1264
    %v1487 = vpack.c.b16 %v1267, %v1266
    %v1488 = vpack.c.b16 %v1269, %v1268
    %v1489 = vpack.c.b16 %v1271, %v1270
    %v1490 = vpack.c.b16 %v1273, %v1272
    %v1491 = vpack.c.b16 %v1275, %v1274
    %v1492 = vpack.c.b16 %v1277, %v1276
    %v1493 = vpack.c.b16 %v1279, %v1278
    %v1494 = vpack.c.b16 %v1281, %v1280
    %v1495 = vpack.c.b16 %v1283, %v1282
    %v1496 = vpack.c.b16 %v1285, %v1284
    %v1497 = vpack.c.b16 %v1287, %v1286
    %v1498 = vpack.c.b16 %v1289, %v1288
    %v1499 = vpack.c.b16 %v1291, %v1290
    %v1500 = vpack.c.b16 %v1293, %v1292
    %v1501 = vpack.c.b16 %v1295, %v1294
    %v1502 = vpack.c.b16 %v1297, %v1296
    %v1503 = vpack.c.b16 %v1299, %v1298
    %v1504 = vpack.c.b16 %v1301, %v1300
    %v1505 = vpack.c.b16 %v1303, %v1302
    %v1506 = vpack.c.b16 %v1305, %v1304
    %v1507 = vpack.c.b16 %v1307, %v1306
    %v1508 = vpack.c.b16 %v1309, %v1308
    %v1509 = vpack.c.b16 %v1311, %v1310
    %v1510 = vpack.c.b16 %v1313, %v1312
    %v1511 = vpack.c.b16 %v1315, %v1314
    %v1512 = vpack.c.b16 %v1317, %v1316
    %v1513 = vpack.c.b16 %v1319, %v1318
    %v1514 = vpack.c.b16 %v1321, %v1320
    %v1515 = vpack.c.b16 %v1323, %v1322
    %1708 = vmatpush.bf16.msra.mxu0 %v1331
    %1709 = vmatpush.bf16.msra.mxu0 %v1330
    %1710 = vmatpush.bf16.msra.mxu0 %v1329
    %1711 = vmatpush.bf16.msra.mxu0 %v1328
    %1712 = vmatpush.bf16.msra.mxu0 %v1327
    %1713 = vmatpush.bf16.msra.mxu0 %v1326
    %1714 = vmatpush.bf16.msra.mxu0 %v1325
    %1715 = vmatpush.bf16.msra.mxu0 %v1324
    %1716 = vmatmul.bf16.gmra.mxu0 %v144
    %v1717 = vpop.f32.mrf.mxu0
    %v1718 = vadd.f32 %v554, %v1717
    %v1719 = vpop.f32.mrf.mxu0
    %v1720 = vadd.f32 %v554, %v1719
    %1721 = vdwg.mxu0
    %1722 = vmatpush.bf16.msra.mxu0 %v1339
    %1723 = vmatpush.bf16.msra.mxu0 %v1338
    %1724 = vmatpush.bf16.msra.mxu0 %v1337
    %1725 = vmatpush.bf16.msra.mxu0 %v1336
    %1726 = vmatpush.bf16.msra.mxu0 %v1335
    %1727 = vmatpush.bf16.msra.mxu0 %v1334
    %1728 = vmatpush.bf16.msra.mxu0 %v1333
    %1729 = vmatpush.bf16.msra.mxu0 %v1332
    %1730 = vmatmul.bf16.gmra.mxu0 %v145
    %v1731 = vpop.f32.mrf.mxu0
    %v1732 = vadd.f32 %v1718, %v1731
    %v1733 = vpop.f32.mrf.mxu0
    %v1734 = vadd.f32 %v1720, %v1733
    %1735 = vdwg.mxu0
    %1736 = vmatpush.bf16.msra.mxu0 %v1347
    %1737 = vmatpush.bf16.msra.mxu0 %v1346
    %1738 = vmatpush.bf16.msra.mxu0 %v1345
    %1739 = vmatpush.bf16.msra.mxu0 %v1344
    %1740 = vmatpush.bf16.msra.mxu0 %v1343
    %1741 = vmatpush.bf16.msra.mxu0 %v1342
    %1742 = vmatpush.bf16.msra.mxu0 %v1341
    %1743 = vmatpush.bf16.msra.mxu0 %v1340
    %1744 = vmatmul.bf16.gmra.mxu0 %v146
    %v1745 = vpop.f32.mrf.mxu0
    %v1746 = vadd.f32 %v1732, %v1745
    %v1747 = vpop.f32.mrf.mxu0
    %v1748 = vadd.f32 %v1734, %v1747
    %1749 = vdwg.mxu0
    %1750 = vmatpush.bf16.msra.mxu0 %v1355
    %1751 = vmatpush.bf16.msra.mxu0 %v1354
    %1752 = vmatpush.bf16.msra.mxu0 %v1353
    %1753 = vmatpush.bf16.msra.mxu0 %v1352
    %1754 = vmatpush.bf16.msra.mxu0 %v1351
    %1755 = vmatpush.bf16.msra.mxu0 %v1350
    %1756 = vmatpush.bf16.msra.mxu0 %v1349
    %1757 = vmatpush.bf16.msra.mxu0 %v1348
    %1758 = vmatmul.bf16.gmra.mxu0 %v147
    %v1759 = vpop.f32.mrf.mxu0
    %v1760 = vadd.f32 %v1746, %v1759
    %v1761 = vpop.f32.mrf.mxu0
    %v1762 = vadd.f32 %v1748, %v1761
    %1763 = vdwg.mxu0
    %1764 = vmatpush.bf16.msra.mxu0 %v1363
    %1765 = vmatpush.bf16.msra.mxu0 %v1362
    %1766 = vmatpush.bf16.msra.mxu0 %v1361
    %1767 = vmatpush.bf16.msra.mxu0 %v1360
    %1768 = vmatpush.bf16.msra.mxu0 %v1359
    %1769 = vmatpush.bf16.msra.mxu0 %v1358
    %1770 = vmatpush.bf16.msra.mxu0 %v1357
    %1771 = vmatpush.bf16.msra.mxu0 %v1356
    %1772 = vmatmul.bf16.gmra.mxu0 %v148
    %v1773 = vpop.f32.mrf.mxu0
    %v1774 = vadd.f32 %v1760, %v1773
    %v1775 = vpop.f32.mrf.mxu0
    %v1776 = vadd.f32 %v1762, %v1775
    %1777 = vdwg.mxu0
    %1778 = vmatpush.bf16.msra.mxu0 %v1371
    %1779 = vmatpush.bf16.msra.mxu0 %v1370
    %1780 = vmatpush.bf16.msra.mxu0 %v1369
    %1781 = vmatpush.bf16.msra.mxu0 %v1368
    %1782 = vmatpush.bf16.msra.mxu0 %v1367
    %1783 = vmatpush.bf16.msra.mxu0 %v1366
    %1784 = vmatpush.bf16.msra.mxu0 %v1365
    %1785 = vmatpush.bf16.msra.mxu0 %v1364
    %1786 = vmatmul.bf16.gmra.mxu0 %v149
    %v1787 = vpop.f32.mrf.mxu0
    %v1788 = vadd.f32 %v1774, %v1787
    %v1789 = vpop.f32.mrf.mxu0
    %v1790 = vadd.f32 %v1776, %v1789
    %1791 = vdwg.mxu0
    %1792 = vmatpush.bf16.msra.mxu0 %v1379
    %1793 = vmatpush.bf16.msra.mxu0 %v1378
    %1794 = vmatpush.bf16.msra.mxu0 %v1377
    %1795 = vmatpush.bf16.msra.mxu0 %v1376
    %1796 = vmatpush.bf16.msra.mxu0 %v1375
    %1797 = vmatpush.bf16.msra.mxu0 %v1374
    %1798 = vmatpush.bf16.msra.mxu0 %v1373
    %1799 = vmatpush.bf16.msra.mxu0 %v1372
    %1800 = vmatmul.bf16.gmra.mxu0 %v150
    %v1801 = vpop.f32.mrf.mxu0
    %v1802 = vadd.f32 %v1788, %v1801
    %v1803 = vpop.f32.mrf.mxu0
    %v1804 = vadd.f32 %v1790, %v1803
    %1805 = vdwg.mxu0
    %1806 = vmatpush.bf16.msra.mxu0 %v1387
    %1807 = vmatpush.bf16.msra.mxu0 %v1386
    %1808 = vmatpush.bf16.msra.mxu0 %v1385
    %1809 = vmatpush.bf16.msra.mxu0 %v1384
    %1810 = vmatpush.bf16.msra.mxu0 %v1383
    %1811 = vmatpush.bf16.msra.mxu0 %v1382
    %1812 = vmatpush.bf16.msra.mxu0 %v1381
    %1813 = vmatpush.bf16.msra.mxu0 %v1380
    %1814 = vmatmul.bf16.gmra.mxu0 %v151
    %v1815 = vpop.f32.mrf.mxu0
    %v1816 = vadd.f32 %v1802, %v1815
    %v1817 = vpop.f32.mrf.mxu0
    %v1818 = vadd.f32 %v1804, %v1817
    %1819 = vdwg.mxu0
    %1820 = vmatpush.bf16.msra.mxu0 %v1395
    %1821 = vmatpush.bf16.msra.mxu0 %v1394
    %1822 = vmatpush.bf16.msra.mxu0 %v1393
    %1823 = vmatpush.bf16.msra.mxu0 %v1392
    %1824 = vmatpush.bf16.msra.mxu0 %v1391
    %1825 = vmatpush.bf16.msra.mxu0 %v1390
    %1826 = vmatpush.bf16.msra.mxu0 %v1389
    %1827 = vmatpush.bf16.msra.mxu0 %v1388
    %1828 = vmatmul.bf16.gmra.mxu0 %v152
    %v1829 = vpop.f32.mrf.mxu0
    %v1830 = vadd.f32 %v1816, %v1829
    %v1831 = vpop.f32.mrf.mxu0
    %v1832 = vadd.f32 %v1818, %v1831
    %1833 = vdwg.mxu0
    %1834 = vmatpush.bf16.msra.mxu0 %v1403
    %1835 = vmatpush.bf16.msra.mxu0 %v1402
    %1836 = vmatpush.bf16.msra.mxu0 %v1401
    %1837 = vmatpush.bf16.msra.mxu0 %v1400
    %1838 = vmatpush.bf16.msra.mxu0 %v1399
    %1839 = vmatpush.bf16.msra.mxu0 %v1398
    %1840 = vmatpush.bf16.msra.mxu0 %v1397
    %1841 = vmatpush.bf16.msra.mxu0 %v1396
    %1842 = vmatmul.bf16.gmra.mxu0 %v153
    %v1843 = vpop.f32.mrf.mxu0
    %v1844 = vadd.f32 %v1830, %v1843
    %v1845 = vpop.f32.mrf.mxu0
    %v1846 = vadd.f32 %v1832, %v1845
    %1847 = vdwg.mxu0
    %1848 = vmatpush.bf16.msra.mxu0 %v1411
    %1849 = vmatpush.bf16.msra.mxu0 %v1410
    %1850 = vmatpush.bf16.msra.mxu0 %v1409
    %1851 = vmatpush.bf16.msra.mxu0 %v1408
    %1852 = vmatpush.bf16.msra.mxu0 %v1407
    %1853 = vmatpush.bf16.msra.mxu0 %v1406
    %1854 = vmatpush.bf16.msra.mxu0 %v1405
    %1855 = vmatpush.bf16.msra.mxu0 %v1404
    %1856 = vmatmul.bf16.gmra.mxu0 %v154
    %v1857 = vpop.f32.mrf.mxu0
    %v1858 = vadd.f32 %v1844, %v1857
    %v1859 = vpop.f32.mrf.mxu0
    %v1860 = vadd.f32 %v1846, %v1859
    %1861 = vdwg.mxu0
    %1862 = vmatpush.bf16.msra.mxu0 %v1419
    %1863 = vmatpush.bf16.msra.mxu0 %v1418
    %1864 = vmatpush.bf16.msra.mxu0 %v1417
    %1865 = vmatpush.bf16.msra.mxu0 %v1416
    %1866 = vmatpush.bf16.msra.mxu0 %v1415
    %1867 = vmatpush.bf16.msra.mxu0 %v1414
    %1868 = vmatpush.bf16.msra.mxu0 %v1413
    %1869 = vmatpush.bf16.msra.mxu0 %v1412
    %1870 = vmatmul.bf16.gmra.mxu0 %v155
    %v1871 = vpop.f32.mrf.mxu0
    %v1872 = vadd.f32 %v1858, %v1871
    %v1873 = vpop.f32.mrf.mxu0
    %v1874 = vadd.f32 %v1860, %v1873
    %1875 = vdwg.mxu0
    %1876 = vmatpush.bf16.msra.mxu0 %v1427
    %1877 = vmatpush.bf16.msra.mxu0 %v1426
    %1878 = vmatpush.bf16.msra.mxu0 %v1425
    %1879 = vmatpush.bf16.msra.mxu0 %v1424
    %1880 = vmatpush.bf16.msra.mxu0 %v1423
    %1881 = vmatpush.bf16.msra.mxu0 %v1422
    %1882 = vmatpush.bf16.msra.mxu0 %v1421
    %1883 = vmatpush.bf16.msra.mxu0 %v1420
    %1884 = vmatmul.bf16.gmra.mxu0 %v156
    %v1885 = vpop.f32.mrf.mxu0
    %v1886 = vadd.f32 %v1872, %v1885
    %v1887 = vpop.f32.mrf.mxu0
    %v1888 = vadd.f32 %v1874, %v1887
    %1889 = vdwg.mxu0
    %1890 = vmatpush.bf16.msra.mxu0 %v1435
    %1891 = vmatpush.bf16.msra.mxu0 %v1434
    %1892 = vmatpush.bf16.msra.mxu0 %v1433
    %1893 = vmatpush.bf16.msra.mxu0 %v1432
    %1894 = vmatpush.bf16.msra.mxu0 %v1431
    %1895 = vmatpush.bf16.msra.mxu0 %v1430
    %1896 = vmatpush.bf16.msra.mxu0 %v1429
    %1897 = vmatpush.bf16.msra.mxu0 %v1428
    %1898 = vmatmul.bf16.gmra.mxu0 %v157
    %v1899 = vpop.f32.mrf.mxu0
    %v1900 = vadd.f32 %v1886, %v1899
    %v1901 = vpop.f32.mrf.mxu0
    %v1902 = vadd.f32 %v1888, %v1901
    %1903 = vdwg.mxu0
    %1904 = vmatpush.bf16.msra.mxu0 %v1443
    %1905 = vmatpush.bf16.msra.mxu0 %v1442
    %1906 = vmatpush.bf16.msra.mxu0 %v1441
    %1907 = vmatpush.bf16.msra.mxu0 %v1440
    %1908 = vmatpush.bf16.msra.mxu0 %v1439
    %1909 = vmatpush.bf16.msra.mxu0 %v1438
    %1910 = vmatpush.bf16.msra.mxu0 %v1437
    %1911 = vmatpush.bf16.msra.mxu0 %v1436
    %1912 = vmatmul.bf16.gmra.mxu0 %v158
    %v1913 = vpop.f32.mrf.mxu0
    %v1914 = vadd.f32 %v1900, %v1913
    %v1915 = vpop.f32.mrf.mxu0
    %v1916 = vadd.f32 %v1902, %v1915
    %1917 = vdwg.mxu0
    %1918 = vmatpush.bf16.msra.mxu0 %v1451
    %1919 = vmatpush.bf16.msra.mxu0 %v1450
    %1920 = vmatpush.bf16.msra.mxu0 %v1449
    %1921 = vmatpush.bf16.msra.mxu0 %v1448
    %1922 = vmatpush.bf16.msra.mxu0 %v1447
    %1923 = vmatpush.bf16.msra.mxu0 %v1446
    %1924 = vmatpush.bf16.msra.mxu0 %v1445
    %1925 = vmatpush.bf16.msra.mxu0 %v1444
    %1926 = vmatmul.bf16.gmra.mxu0 %v159
    %v1927 = vpop.f32.mrf.mxu0
    %v1928 = vadd.f32 %v1914, %v1927
    %v1929 = vpop.f32.mrf.mxu0
    %v1930 = vadd.f32 %v1916, %v1929
    %1931 = vdwg.mxu0
    %1932 = vmatpush.bf16.msra.mxu0 %v1459
    %1933 = vmatpush.bf16.msra.mxu0 %v1458
    %1934 = vmatpush.bf16.msra.mxu0 %v1457
    %1935 = vmatpush.bf16.msra.mxu0 %v1456
    %1936 = vmatpush.bf16.msra.mxu0 %v1455
    %1937 = vmatpush.bf16.msra.mxu0 %v1454
    %1938 = vmatpush.bf16.msra.mxu0 %v1453
    %1939 = vmatpush.bf16.msra.mxu0 %v1452
    %1940 = vmatmul.bf16.gmra.mxu0 %v160
    %v1941 = vpop.f32.mrf.mxu0
    %v1942 = vadd.f32 %v1928, %v1941
    %v1943 = vpop.f32.mrf.mxu0
    %v1944 = vadd.f32 %v1930, %v1943
    %1945 = vdwg.mxu0
    %1946 = vmatpush.bf16.msra.mxu0 %v1467
    %1947 = vmatpush.bf16.msra.mxu0 %v1466
    %1948 = vmatpush.bf16.msra.mxu0 %v1465
    %1949 = vmatpush.bf16.msra.mxu0 %v1464
    %1950 = vmatpush.bf16.msra.mxu0 %v1463
    %1951 = vmatpush.bf16.msra.mxu0 %v1462
    %1952 = vmatpush.bf16.msra.mxu0 %v1461
    %1953 = vmatpush.bf16.msra.mxu0 %v1460
    %1954 = vmatmul.bf16.gmra.mxu0 %v161
    %v1955 = vpop.f32.mrf.mxu0
    %v1956 = vadd.f32 %v1942, %v1955
    %v1957 = vpop.f32.mrf.mxu0
    %v1958 = vadd.f32 %v1944, %v1957
    %1959 = vdwg.mxu0
    %1960 = vmatpush.bf16.msra.mxu0 %v1475
    %1961 = vmatpush.bf16.msra.mxu0 %v1474
    %1962 = vmatpush.bf16.msra.mxu0 %v1473
    %1963 = vmatpush.bf16.msra.mxu0 %v1472
    %1964 = vmatpush.bf16.msra.mxu0 %v1471
    %1965 = vmatpush.bf16.msra.mxu0 %v1470
    %1966 = vmatpush.bf16.msra.mxu0 %v1469
    %1967 = vmatpush.bf16.msra.mxu0 %v1468
    %1968 = vmatmul.bf16.gmra.mxu0 %v162
    %v1969 = vpop.f32.mrf.mxu0
    %v1970 = vadd.f32 %v1956, %v1969
    %v1971 = vpop.f32.mrf.mxu0
    %v1972 = vadd.f32 %v1958, %v1971
    %1973 = vdwg.mxu0
    %1974 = vmatpush.bf16.msra.mxu0 %v1483
    %1975 = vmatpush.bf16.msra.mxu0 %v1482
    %1976 = vmatpush.bf16.msra.mxu0 %v1481
    %1977 = vmatpush.bf16.msra.mxu0 %v1480
    %1978 = vmatpush.bf16.msra.mxu0 %v1479
    %1979 = vmatpush.bf16.msra.mxu0 %v1478
    %1980 = vmatpush.bf16.msra.mxu0 %v1477
    %1981 = vmatpush.bf16.msra.mxu0 %v1476
    %1982 = vmatmul.bf16.gmra.mxu0 %v163
    %v1983 = vpop.f32.mrf.mxu0
    %v1984 = vadd.f32 %v1970, %v1983
    %v1985 = vpop.f32.mrf.mxu0
    %v1986 = vadd.f32 %v1972, %v1985
    %1987 = vdwg.mxu0
    %1988 = vmatpush.bf16.msra.mxu0 %v1491
    %1989 = vmatpush.bf16.msra.mxu0 %v1490
    %1990 = vmatpush.bf16.msra.mxu0 %v1489
    %1991 = vmatpush.bf16.msra.mxu0 %v1488
    %1992 = vmatpush.bf16.msra.mxu0 %v1487
    %1993 = vmatpush.bf16.msra.mxu0 %v1486
    %1994 = vmatpush.bf16.msra.mxu0 %v1485
    %1995 = vmatpush.bf16.msra.mxu0 %v1484
    %1996 = vmatmul.bf16.gmra.mxu0 %v164
    %v1997 = vpop.f32.mrf.mxu0
    %v1998 = vadd.f32 %v1984, %v1997
    %v1999 = vpop.f32.mrf.mxu0
    %v2000 = vadd.f32 %v1986, %v1999
    %2001 = vdwg.mxu0
    %2002 = vmatpush.bf16.msra.mxu0 %v1499
    %2003 = vmatpush.bf16.msra.mxu0 %v1498
    %2004 = vmatpush.bf16.msra.mxu0 %v1497
    %2005 = vmatpush.bf16.msra.mxu0 %v1496
    %2006 = vmatpush.bf16.msra.mxu0 %v1495
    %2007 = vmatpush.bf16.msra.mxu0 %v1494
    %2008 = vmatpush.bf16.msra.mxu0 %v1493
    %2009 = vmatpush.bf16.msra.mxu0 %v1492
    %2010 = vmatmul.bf16.gmra.mxu0 %v165
    %v2011 = vpop.f32.mrf.mxu0
    %v2012 = vadd.f32 %v1998, %v2011
    %v2013 = vpop.f32.mrf.mxu0
    %v2014 = vadd.f32 %v2000, %v2013
    %2015 = vdwg.mxu0
    %2016 = vmatpush.bf16.msra.mxu0 %v1507
    %2017 = vmatpush.bf16.msra.mxu0 %v1506
    %2018 = vmatpush.bf16.msra.mxu0 %v1505
    %2019 = vmatpush.bf16.msra.mxu0 %v1504
    %2020 = vmatpush.bf16.msra.mxu0 %v1503
    %2021 = vmatpush.bf16.msra.mxu0 %v1502
    %2022 = vmatpush.bf16.msra.mxu0 %v1501
    %2023 = vmatpush.bf16.msra.mxu0 %v1500
    %2024 = vmatmul.bf16.gmra.mxu0 %v166
    %v2025 = vpop.f32.mrf.mxu0
    %v2026 = vadd.f32 %v2012, %v2025
    %v2027 = vpop.f32.mrf.mxu0
    %v2028 = vadd.f32 %v2014, %v2027
    %2029 = vdwg.mxu0
    %2030 = vmatpush.bf16.msra.mxu0 %v1515
    %2031 = vmatpush.bf16.msra.mxu0 %v1514
    %2032 = vmatpush.bf16.msra.mxu0 %v1513
    %2033 = vmatpush.bf16.msra.mxu0 %v1512
    %2034 = vmatpush.bf16.msra.mxu0 %v1511
    %2035 = vmatpush.bf16.msra.mxu0 %v1510
    %2036 = vmatpush.bf16.msra.mxu0 %v1509
    %2037 = vmatpush.bf16.msra.mxu0 %v1508
    %2038 = vmatmul.bf16.gmra.mxu0 %v167
    %v2039 = vpop.f32.mrf.mxu0
    %v2040 = vadd.f32 %v2026, %v2039
    %v2041 = vpop.f32.mrf.mxu0
    %v2042 = vadd.f32 %v2028, %v2041
    %2043 = vdwg.mxu0
    %v2044 = vmax.f32 %v2040, 0.0
    %v2045 = vmax.f32 %v2042, 0.0
    %v2046 = vld [vmem:[%s3] sm:$0x1]
    %v2048 = vperm.slane %v2046, 0
    %v2050 = vadd.f32 %v2044, %v2048
    %v2051 = vadd.f32 %v2045, %v2048
    %v2052 = vpack.c.bf16 %v2051, %v2050
    %v2053 = vld [vmem:[#allocation7] sm:$0xf]
    %v2054 = vld [vmem:[#allocation7 + $0x4] sm:$0xf]
    %v2055 = vld [vmem:[#allocation7 + $0x8] sm:$0xf]
    %v2056 = vld [vmem:[#allocation7 + $0xc] sm:$0xf]
    %v2057 = vld [vmem:[#allocation7 + $0x10] sm:$0xf]
    %v2058 = vld [vmem:[#allocation7 + $0x14] sm:$0xf]
    %v2059 = vld [vmem:[#allocation7 + $0x18] sm:$0xf]
    %v2060 = vld [vmem:[#allocation7 + $0x1c] sm:$0xf]
    %v2061 = vld [vmem:[#allocation7 + $0x20] sm:$0xf]
    %v2062 = vld [vmem:[#allocation7 + $0x24] sm:$0xf]
    %v2063 = vld [vmem:[#allocation7 + $0x28] sm:$0xf]
    %v2064 = vld [vmem:[#allocation7 + $0x2c] sm:$0xf]
    %v2065 = vld [vmem:[#allocation7 + $0x30] sm:$0xf]
    %v2066 = vld [vmem:[#allocation7 + $0x34] sm:$0xf]
    %v2067 = vld [vmem:[#allocation7 + $0x38] sm:$0xf]
    %v2068 = vld [vmem:[#allocation7 + $0x3c] sm:$0xf]
    %v2069 = vld [vmem:[%s5] sm:$0x1]
    %v2071 = vperm.slane %v2069, 0
    %v2089 = vunpack.c.l.b16 %v2053
    %v2090 = vunpack.c.l.b16 %v2054
    %v2091 = vunpack.c.l.b16 %v2055
    %v2092 = vunpack.c.l.b16 %v2056
    %v2093 = vunpack.c.l.b16 %v2057
    %v2094 = vunpack.c.l.b16 %v2058
    %v2095 = vunpack.c.l.b16 %v2059
    %v2096 = vunpack.c.l.b16 %v2060
    %v2097 = vunpack.c.l.b16 %v2061
    %v2098 = vunpack.c.l.b16 %v2062
    %v2099 = vunpack.c.l.b16 %v2063
    %v2100 = vunpack.c.l.b16 %v2064
    %v2101 = vunpack.c.l.b16 %v2065
    %v2102 = vunpack.c.l.b16 %v2066
    %v2103 = vunpack.c.l.b16 %v2067
    %v2104 = vunpack.c.l.b16 %v2068
    %v2105 = vpack.c.b16 %v2090, %v2089
    %v2106 = vpack.c.b16 %v2092, %v2091
    %v2107 = vpack.c.b16 %v2094, %v2093
    %v2108 = vpack.c.b16 %v2096, %v2095
    %v2109 = vpack.c.b16 %v2098, %v2097
    %v2110 = vpack.c.b16 %v2100, %v2099
    %v2111 = vpack.c.b16 %v2102, %v2101
    %v2112 = vpack.c.b16 %v2104, %v2103
    %2121 = vmatpush.bf16.msra.mxu0 %v2112
    %2122 = vmatpush.bf16.msra.mxu0 %v2111
    %2123 = vmatpush.bf16.msra.mxu0 %v2110
    %2124 = vmatpush.bf16.msra.mxu0 %v2109
    %2125 = vmatpush.bf16.msra.mxu0 %v2108
    %2126 = vmatpush.bf16.msra.mxu0 %v2107
    %2127 = vmatpush.bf16.msra.mxu0 %v2106
    %2128 = vmatpush.bf16.msra.mxu0 %v2105
    %2129 = vmatmul.bf16.gmra.mxu0 %v2052
    %v2130 = vpop.f32.mrf.mxu0
    %v2131 = vadd.f32 %v2071, %v2130
    %v2132 = vpop.f32.mrf.mxu0
    %v2133 = vadd.f32 %v2071, %v2132
    %2134 = vdwg.mxu0
    %v2135 = vmax.f32 %v2131, 0.0
    %v2136 = vmax.f32 %v2133, 0.0
    %v2137 = vld [vmem:[%s6] sm:$0x1]
    %v2139 = vperm.slane %v2137, 0
    %v2141 = vadd.f32 %v2135, %v2139
    %v2142 = vadd.f32 %v2136, %v2139
    %v2143 = vpack.c.bf16 %v2142, %v2141
    %v2144 = vld [vmem:[#allocation8] sm:$0xf]
    %v2145 = vld [vmem:[#allocation8 + $0x4] sm:$0xf]
    %v2146 = vld [vmem:[#allocation8 + $0x8] sm:$0xf]
    %v2147 = vld [vmem:[#allocation8 + $0xc] sm:$0xf]
    %v2148 = vld [vmem:[#allocation8 + $0x10] sm:$0xf]
    %v2149 = vld [vmem:[#allocation8 + $0x14] sm:$0xf]
    %v2150 = vld [vmem:[#allocation8 + $0x18] sm:$0xf]
    %v2151 = vld [vmem:[#allocation8 + $0x1c] sm:$0xf]
    %v2152 = vld [vmem:[#allocation8 + $0x20] sm:$0xf]
    %v2153 = vld [vmem:[#allocation8 + $0x24] sm:$0xf]
    %v2154 = vld [vmem:[#allocation8 + $0x28] sm:$0xf]
    %v2155 = vld [vmem:[#allocation8 + $0x2c] sm:$0xf]
    %v2156 = vld [vmem:[#allocation8 + $0x30] sm:$0xf]
    %v2157 = vld [vmem:[#allocation8 + $0x34] sm:$0xf]
    %v2158 = vld [vmem:[#allocation8 + $0x38] sm:$0xf]
    %v2159 = vld [vmem:[#allocation8 + $0x3c] sm:$0xf]
    %v2160 = vld [vmem:[%s8] sm:$0x1]
    %v2162 = vperm.slane %v2160, 0
    %v2180 = vunpack.c.l.b16 %v2144
    %v2181 = vunpack.c.l.b16 %v2145
    %v2182 = vunpack.c.l.b16 %v2146
    %v2183 = vunpack.c.l.b16 %v2147
    %v2184 = vunpack.c.l.b16 %v2148
    %v2185 = vunpack.c.l.b16 %v2149
    %v2186 = vunpack.c.l.b16 %v2150
    %v2187 = vunpack.c.l.b16 %v2151
    %v2188 = vunpack.c.l.b16 %v2152
    %v2189 = vunpack.c.l.b16 %v2153
    %v2190 = vunpack.c.l.b16 %v2154
    %v2191 = vunpack.c.l.b16 %v2155
    %v2192 = vunpack.c.l.b16 %v2156
    %v2193 = vunpack.c.l.b16 %v2157
    %v2194 = vunpack.c.l.b16 %v2158
    %v2195 = vunpack.c.l.b16 %v2159
    %v2196 = vpack.c.b16 %v2181, %v2180
    %v2197 = vpack.c.b16 %v2183, %v2182
    %v2198 = vpack.c.b16 %v2185, %v2184
    %v2199 = vpack.c.b16 %v2187, %v2186
    %v2200 = vpack.c.b16 %v2189, %v2188
    %v2201 = vpack.c.b16 %v2191, %v2190
    %v2202 = vpack.c.b16 %v2193, %v2192
    %v2203 = vpack.c.b16 %v2195, %v2194
    %2212 = vmatpush.bf16.msra.mxu0 %v2203
    %2213 = vmatpush.bf16.msra.mxu0 %v2202
    %2214 = vmatpush.bf16.msra.mxu0 %v2201
    %2215 = vmatpush.bf16.msra.mxu0 %v2200
    %2216 = vmatpush.bf16.msra.mxu0 %v2199
    %2217 = vmatpush.bf16.msra.mxu0 %v2198
    %2218 = vmatpush.bf16.msra.mxu0 %v2197
    %2219 = vmatpush.bf16.msra.mxu0 %v2196
    %2220 = vmatmul.bf16.gmra.mxu0 %v2143
    %v2221 = vpop.f32.mrf.mxu0
    %v2222 = vadd.f32 %v2162, %v2221
    %v2223 = vpop.f32.mrf.mxu0
    %v2224 = vadd.f32 %v2162, %v2223
    %2225 = vdwg.mxu0
    %2226 = vmax.xlane.f32.xlu0 %v2222
    %v2227 = vpop.xlane.xlu0 %2226
    %2228 = vmax.xlane.f32.xlu0 %v2224
    %v2229 = vpop.xlane.xlu0 %2228
    %v2230 = vsub.f32 %v2222, %v2227
    %v2231 = vsub.f32 %v2224, %v2229
    %v2232 = vmul.f32 %v2230, 1.442695
    %v2233 = vpow.pop %v2232
    %v2234 = vmul.f32 %v2231, 1.442695
    %v2235 = vpow.pop %v2234
    %2236 = vadd.xlane.f32.xlu0 %v2233
    %v2237 = vpop.xlane.xlu0 %2236
    %2238 = vadd.xlane.f32.xlu0 %v2235
    %v2239 = vpop.xlane.xlu0 %2238
    %v2240 = vrcp.pop %v2237
    %v2241 = vmul.f32 %v2237, %v2240
    %v2242 = vsub.f32 1.0, %v2241
    %v2243 = vmul.f32 %v2240, %v2242
    %v2244 = vadd.f32 %v2240, %v2243
    %vm2245 = vweird.f32 %v2237
    %vm2246 = vweird.f32 %v2240
    %vm2247 = vmor %vm2245, %vm2246
    %v2248 = vsel %vm2247, %v2240, %v2244
    %v2249 = vand.u32 2147483647, %v2237
    %vm2250 = vcmp.eq.f32.partialorder %v2249, 8.507059e+37
    %v2251 = vand.u32 %v2237, 2147483648
    %v2252 = vor.u32 1.1754944e-38, %v2251
    %v2253 = vsel %vm2250, %v2252, %v2248
    %v2254 = vmul.f32 %v2233, %v2253
    %v2255 = vrcp.pop %v2239
    %v2256 = vmul.f32 %v2239, %v2255
    %v2257 = vsub.f32 1.0, %v2256
    %v2258 = vmul.f32 %v2255, %v2257
    %v2259 = vadd.f32 %v2255, %v2258
    %vm2260 = vweird.f32 %v2239
    %vm2261 = vweird.f32 %v2255
    %vm2262 = vmor %vm2260, %vm2261
    %v2263 = vsel %vm2262, %v2255, %v2259
    %v2264 = vand.u32 2147483647, %v2239
    %vm2265 = vcmp.eq.f32.partialorder %v2264, 8.507059e+37
    %v2266 = vand.u32 %v2239, 2147483648
    %v2267 = vor.u32 1.1754944e-38, %v2266
    %v2268 = vsel %vm2265, %v2267, %v2263
    %v2269 = vmul.f32 %v2235, %v2268
    %v2270 = vpack.c.bf16 %v2254, %v2254
    %v2271 = vpack.c.bf16 %v2269, %v2269
    %2272 = vst [vmem:[#allocation10] sm:$0xf] %v2270
    %2273 = vst [vmem:[#allocation10 + $0x4] sm:$0xf] %v2271
    // Predicated region
    $region54: #{tpu_custom_call.1} parent=1 // pred_check
      _
    $region55: #{tpu_custom_call.1} parent=1 // pred_check_branch
      %2275 = sbr.rel (0) target = $region57
    $region56: #{tpu_custom_call.1} parent=1 // pred_region
      %2277 = vsyncadd [#allocation4], 0
      %s2278 = sshll.u32 [#allocation10], 4
      %s2279 = int_to_ptr.vmem [resolvable:$true] %s2278
      %s2280 = sshll.u32 %s9, 4
      %s2281 = int_to_ptr.hbm [resolvable:$true] %s2280
      %2286 = dma.vmem_to_hbm [thread:$0]  %s2279, 128, %s2281, [#allocation4], 64, 64, 4
    $region57: #{tpu_custom_call.1} parent=1 // pred_fallthru
      _
    // Predicated region
    $region58: #{tpu_custom_call.1} parent=1 // pred_check
      _
    $region59: #{tpu_custom_call.1} parent=1 // pred_check_branch
      %2288 = sbr.rel (0) target = $region61
    $region60: #{tpu_custom_call.1} parent=1 // pred_region
      %2290 = dma.done [#allocation4], 128
    $region61: #{tpu_custom_call.1} parent=1 // pred_fallthru
      _
    %2291 = vsyncpa [#allocation3], 1
    %2292 = vsyncpa [#allocation6], 1
    %2293 = vsyncpa [#allocation9], 1
    %2294 = vsyncpa [#allocation4], 1

</llo_original>
